<compile_context>
chip_gen: v7x
topology: tpu7x:2x2x1
jax: 0.10.0
libtpu: 0.0.40
codegen_flags: <defaults>
</compile_context>

<pallas_src>
import math

import jax
import jax.numpy as jnp
from jax.experimental import pallas as pl
from jax.experimental.pallas import tpu as pltpu


def _round_up(v, m):
    return ((v + m - 1) // m) * m


def _repeat_ae_kernel(x_ref, wih_e_ref, whh_e_ref, b_e_ref,
                      wih_d_ref, whh_d_ref, b_d_ref,
                      wfc_ref, bfc_ref, out_ref):
    """Fused RepeatAutoencoder forward for one batch block (all refs in VMEM).

    Shapes (already padded / laid out by the wrapper):
      x_ref     : (T, Bb, I)   encoder input, TIME-major, batch zero-padded
      wih_e_ref : (I,  4G)     encoder W_ih^T   (G = in-kernel gate width)
      whh_e_ref : (G,  4G)     encoder W_hh^T
      b_e_ref   : (1,  4G)     encoder b_ih + b_hh (f32)
      wih_d_ref : (G,  4G)     decoder W_ih^T
      whh_d_ref : (G,  4G)     decoder W_hh^T
      b_d_ref   : (1,  4G)     decoder b_ih + b_hh (f32)
      wfc_ref   : (G,  Op)     fc weight^T, cols zero-padded to Op = k*128
      bfc_ref   : (1,  Op)
      out_ref   : (T, Bb, Op)  fc output, time-major (wrapper transposes/slices)

    G = H when 4*H <= 128 (packed gates, no per-gate padding); otherwise
    G = round_up(H, 128) so each gate block is a whole number of lane tiles.
    Padded gate lanes stay exactly zero through the recurrence (zero W_hh
    columns -> pre = 0 -> g = tanh(0) = 0 -> c = h = 0 on those lanes).
    """
    T, Bb, I = x_ref.shape
    G, four_g = whh_e_ref.shape
    packed = four_g <= 128          # static (Python) decision

    wih_e = wih_e_ref[...]
    whh_e = whh_e_ref[...]
    b_e = b_e_ref[...]
    wih_d = wih_d_ref[...]
    whh_d = whh_d_ref[...]
    b_d = b_d_ref[...]

    def gates(pre):
        # PyTorch gate order: i, f, g, o.
        if packed:
            # Small H: the whole pre-activation fits one 128-lane tile. Run
            # ONE sigmoid pass and ONE tanh pass over the packed vreg (EUP),
            # then pick per-gate lane blocks (XLU lane shifts; the XLU slot is
            # otherwise idle in this recurrence).
            s = jax.nn.sigmoid(pre)
            th = jnp.tanh(pre)
            return s[:, 0:G], s[:, G:2 * G], th[:, 2 * G:3 * G], s[:, 3 * G:4 * G]
        # Large H: each gate block is lane-tile aligned; slice then activate.
        return (jax.nn.sigmoid(pre[:, 0:G]),
                jax.nn.sigmoid(pre[:, G:2 * G]),
                jnp.tanh(pre[:, 2 * G:3 * G]),
                jax.nn.sigmoid(pre[:, 3 * G:4 * G]))

    def lstm_step(pre, c, first):
        i_g, f_g, g_g, o_g = gates(pre)
        c_new = i_g * g_g if first else f_g * c + i_g * g_g   # c == 0 at t == 0
        h_new = o_g * jnp.tanh(c_new)
        return h_new, c_new

    # ---- Encoder LSTM ------------------------------------------------------
    # Input projection for all T steps hoisted into one bulk MXU matmul.
    # Time-major layout => per-step slice xp_all[t] is a contiguous vreg slab.
    x2d = x_ref[...].reshape(T * Bb, I).astype(wih_e.dtype)
    xp_all = (jnp.dot(x2d, wih_e, preferred_element_type=jnp.float32)
              + b_e).reshape(T, Bb, four_g)

    h = c = None
    for t in range(T):              # T small & static -> full unroll
        if t == 0:
            pre = xp_all[0]         # h == 0: skip the recurrent matmul
        else:
            pre = xp_all[t] + jnp.dot(h.astype(whh_e.dtype), whh_e,
                                      preferred_element_type=jnp.float32)
        h, c = lstm_step(pre, c, t == 0)
    # h == encoder hidden[-1]  (num_layers == 1).

    # ---- Decoder LSTM over the repeated encoder hidden ---------------------
    # Decoder input is identical at every step -> projection hoisted out.
    xp_d = jnp.dot(h.astype(wih_d.dtype), wih_d,
                   preferred_element_type=jnp.float32) + b_d
    hd = cd = None
    hs = []
    for t in range(T):
        if t == 0:
            pre = xp_d              # hd == 0: skip the recurrent matmul
        else:
            pre = xp_d + jnp.dot(hd.astype(whh_d.dtype), whh_d,
                                 preferred_element_type=jnp.float32)
        hd, cd = lstm_step(pre, cd, t == 0)
        hs.append(hd)               # stays in vregs; no scratch stores

    # ---- fc head: one bulk matmul + one full-tile, lane-dense store --------
    hseq = jnp.concatenate(hs, axis=0)       # (T*Bb, G), time-major slabs
    y = (jnp.dot(hseq.astype(wfc_ref.dtype), wfc_ref[...],
                 preferred_element_type=jnp.float32) + bfc_ref[...])
    out_ref[...] = y.reshape(T, Bb, -1).astype(out_ref.dtype)


def repeat_autoencoder(x, params, *, weight_dtype=jnp.float32, batch_blocks=1):
    """x: (B, T, input_dim), batch_first (like the torch module).
    Returns (B, T, output_dim).

    weight_dtype : jnp.float32 (default, exact parity) or jnp.bfloat16 for
      large H on v6e/v7x (halves weight VMEM/DMA, native-rate MXU); gate math,
      state and accumulation stay f32 (required on v5e: no bf16 VPU/EUP).
    batch_blocks : 1 = single fused invocation on one TensorCore.  Set 2 on
      v7x when the padded batch is >= 16 so each core runs half the batch
      (grid axis "parallel"; weights stay resident via constant index_maps).
    """
    # TODO(synk): only num_layers == 1 LSTMs implemented (module default).
    B, T, I = x.shape
    H = params["w_hh_e"].shape[-1]
    O = params["b_fc"].shape[-1]

    packed = 4 * H <= 128
    G = H if packed else _round_up(H, 128)   # gate width used inside kernel
    Op = _round_up(O, 128)                   # lane-dense fc output / stores
    Bp = _round_up(max(B, 8), 8)             # batch -> full sublane groups
    Bp = _round_up(Bp, 8 * batch_blocks)
    Bb = Bp // batch_blocks

    def gate_pad_cols(w_t):                  # (K, 4H) -> (K, 4G), per-gate pad
        K = w_t.shape[0]
        return jnp.pad(w_t.reshape(K, 4, H),
                       ((0, 0), (0, 0), (0, G - H))).reshape(K, 4 * G)

    def gate_pad_bias(b):                    # (4H,) -> (1, 4G)
        return jnp.pad(b.reshape(4, H), ((0, 0), (0, G - H))).reshape(1, 4 * G)

    def pad_rows(w, rows):                   # (r, c) -> (rows, c)
        return jnp.pad(w, ((0, rows - w.shape[0]), (0, 0)))

    wd = weight_dtype
    wih_e = gate_pad_cols(params["w_ih_e"].T).astype(wd)                  # (I, 4G)
    whh_e = pad_rows(gate_pad_cols(params["w_hh_e"].T), G).astype(wd)     # (G, 4G)
    b_e = gate_pad_bias(params["b_ih_e"] + params["b_hh_e"])              # (1, 4G) f32
    wih_d = pad_rows(gate_pad_cols(params["w_ih_d"].T), G).astype(wd)     # (G, 4G)
    whh_d = pad_rows(gate_pad_cols(params["w_hh_d"].T), G).astype(wd)     # (G, 4G)
    b_d = gate_pad_bias(params["b_ih_d"] + params["b_hh_d"])              # (1, 4G) f32
    wfc = jnp.pad(pad_rows(params["w_fc"].T, G),
                  ((0, 0), (0, Op - O))).astype(wd)                       # (G, Op)
    bfc = jnp.pad(params["b_fc"], (0, Op - O))[None, :]                   # (1, Op) f32

    # Time-major input so the per-step in-kernel slice is a contiguous slab.
    # NOTE: padded batch ROWS are NOT zero through the recurrence (biases make
    # them drift); they are simply dropped by the [:B] slice below.
    x_tm = jnp.pad(jnp.transpose(x, (1, 0, 2)), ((0, 0), (0, Bp - B), (0, 0)))

    weights = (wih_e, whh_e, b_e, wih_d, whh_d, b_d, wfc, bfc)

    # Everything-resident design: size the scoped-VMEM limit to what we use.
    # (f32 weights cap out near G ~ 1100 on v7x's 64 MiB; beyond that use
    # bf16 weights or tile the 4G gate columns with a grid.)
    w_bytes = sum(int(w.size) * w.dtype.itemsize for w in weights)
    act_bytes = 4 * (T * Bp * (I + 4 * G + G + Op))      # x, xp_all, hseq, y (f32)
    vmem_limit = int(min(max(2 * (w_bytes + act_bytes) + (8 << 20), 16 << 20),
                         64 << 20))

    out_shape = jax.ShapeDtypeStruct((T, Bp, Op), x.dtype)

    if batch_blocks == 1:
        out = pl.pallas_call(
            _repeat_ae_kernel,
            out_shape=out_shape,
            in_specs=[pl.BlockSpec(memory_space=pltpu.MemorySpace.VMEM)] * 9,
            out_specs=pl.BlockSpec(memory_space=pltpu.MemorySpace.VMEM),
            compiler_params=pltpu.CompilerParams(vmem_limit_bytes=vmem_limit),
        )(x_tm, *weights)
    else:
        # Batch grid: one batch block per grid step; on v7x with
        # dimension_semantics=("parallel",) the two TensorCores each take half.
        # Weights use a constant index_map so they are not re-fetched.
        in_specs = ([pl.BlockSpec((T, Bb, I), lambda b: (0, b, 0))]
                    + [pl.BlockSpec(w.shape, lambda b: (0, 0)) for w in weights])
        out = pl.pallas_call(
            _repeat_ae_kernel,
            out_shape=out_shape,
            grid=(batch_blocks,),
            in_specs=in_specs,
            out_specs=pl.BlockSpec((T, Bb, Op), lambda b: (0, b, 0)),
            compiler_params=pltpu.CompilerParams(
                dimension_semantics=("parallel",),
                vmem_limit_bytes=vmem_limit),
        )(x_tm, *weights)

    # Time-major -> batch-major; drop batch / output-lane padding.
    return jnp.transpose(out, (1, 0, 2))[:B, :, :O]


def init_params(key, input_dim, hidden_dim, output_dim):
    """Deterministic params matching PyTorch default uniform(-1/sqrt(H), 1/sqrt(H))."""
    H = hidden_dim
    bound = 1.0 / math.sqrt(H)
    keys = jax.random.split(key, 10)

    def u(k, shape):
        return jax.random.uniform(k, shape, jnp.float32, -bound, bound)

    return dict(
        w_ih_e=u(keys[0], (4 * H, input_dim)),
        w_hh_e=u(keys[1], (4 * H, H)),
        b_ih_e=u(keys[2], (4 * H,)),
        b_hh_e=u(keys[3], (4 * H,)),
        w_ih_d=u(keys[4], (4 * H, H)),
        w_hh_d=u(keys[5], (4 * H, H)),
        b_ih_d=u(keys[6], (4 * H,)),
        b_hh_d=u(keys[7], (4 * H,)),
        w_fc=u(keys[8], (output_dim, H)),
        b_fc=u(keys[9], (output_dim,)),
    )


def reference(x, params):
    """Pure-JAX reference of the PyTorch forward (for correctness check)."""
    B, T, _ = x.shape
    H = params["w_hh_e"].shape[-1]

    def lstm(xs, wih, whh, b):
        h = jnp.zeros((B, H), jnp.float32)
        c = jnp.zeros((B, H), jnp.float32)
        hs = []
        for t in range(T):
            g = xs[:, t, :] @ wih.T + h @ whh.T + b
            i = jax.nn.sigmoid(g[:, 0 * H:1 * H])
            f = jax.nn.sigmoid(g[:, 1 * H:2 * H])
            gg = jnp.tanh(g[:, 2 * H:3 * H])
            o = jax.nn.sigmoid(g[:, 3 * H:4 * H])
            c = f * c + i * gg
            h = o * jnp.tanh(c)
            hs.append(h)
        return jnp.stack(hs, axis=1), h

    _, h_enc = lstm(x, params["w_ih_e"], params["w_hh_e"],
                    params["b_ih_e"] + params["b_hh_e"])
    dec_in = jnp.broadcast_to(h_enc[:, None, :], (B, T, H))  # repeat hidden[-1]
    hseq, _ = lstm(dec_in, params["w_ih_d"], params["w_hh_d"],
                   params["b_ih_d"] + params["b_hh_d"])
    return hseq @ params["w_fc"].T + params["b_fc"]


if __name__ == "__main__":
    input_dim, hidden_dim, output_dim = 32, 32, 16
    batch, seq_len = 2, 8

    key = jax.random.PRNGKey(0)
    k_in, k_par, k_in2 = jax.random.split(key, 3)
    x = jax.random.normal(k_in, (batch, seq_len, input_dim), jnp.float32)
    params = init_params(k_par, input_dim, hidden_dim, output_dim)

    # Single-core fused path (small default configuration).
    out = jax.block_until_ready(repeat_autoencoder(x, params))
    ref = reference(x, params)
    assert out.shape == (batch, seq_len, output_dim), out.shape
    err = float(jnp.max(jnp.abs(out - ref)))
    assert err < 1e-3, err

    # Batch-grid path (enable on v7x with 2 TensorCores when padded batch >= 16).
    # Correct on any chip; only a perf win when a second core exists.
    x2 = jax.random.normal(k_in2, (16, seq_len, input_dim), jnp.float32)
    out2 = jax.block_until_ready(repeat_autoencoder(x2, params, batch_blocks=2))
    ref2 = reference(x2, params)
    err2 = float(jnp.max(jnp.abs(out2 - ref2)))
    assert err2 < 1e-3, err2

    print("KERNEL_OK")
</pallas_src>

<mosaic_0001>
module attributes {stable_mosaic.version = 11 : i64} {
  func.func @_repeat_ae_kernel(%arg0: memref<8x8x32xf32, #tpu.memory_space<vmem>>, %arg1: memref<32x128xf32, #tpu.memory_space<vmem>>, %arg2: memref<32x128xf32, #tpu.memory_space<vmem>>, %arg3: memref<1x128xf32, #tpu.memory_space<vmem>>, %arg4: memref<32x128xf32, #tpu.memory_space<vmem>>, %arg5: memref<32x128xf32, #tpu.memory_space<vmem>>, %arg6: memref<1x128xf32, #tpu.memory_space<vmem>>, %arg7: memref<32x128xf32, #tpu.memory_space<vmem>>, %arg8: memref<1x128xf32, #tpu.memory_space<vmem>>, %arg9: memref<8x8x128xf32, #tpu.memory_space<vmem>>) attributes {dimension_semantics = [], scalar_prefetch = 0 : i64, scratch_operands = 0 : i64, tpu.core_type = #tpu.core_type<tc>} {
    %c0 = arith.constant 0 : index
    %c0_0 = arith.constant 0 : index
    %0 = vector.load %arg1[%c0, %c0_0] : memref<32x128xf32, #tpu.memory_space<vmem>>, vector<32x128xf32>
    %c0_1 = arith.constant 0 : index
    %c0_2 = arith.constant 0 : index
    %1 = vector.load %arg2[%c0_1, %c0_2] : memref<32x128xf32, #tpu.memory_space<vmem>>, vector<32x128xf32>
    %c0_3 = arith.constant 0 : index
    %c0_4 = arith.constant 0 : index
    %2 = vector.load %arg3[%c0_3, %c0_4] : memref<1x128xf32, #tpu.memory_space<vmem>>, vector<1x128xf32>
    %c0_5 = arith.constant 0 : index
    %c0_6 = arith.constant 0 : index
    %3 = vector.load %arg4[%c0_5, %c0_6] : memref<32x128xf32, #tpu.memory_space<vmem>>, vector<32x128xf32>
    %c0_7 = arith.constant 0 : index
    %c0_8 = arith.constant 0 : index
    %4 = vector.load %arg5[%c0_7, %c0_8] : memref<32x128xf32, #tpu.memory_space<vmem>>, vector<32x128xf32>
    %c0_9 = arith.constant 0 : index
    %c0_10 = arith.constant 0 : index
    %5 = vector.load %arg6[%c0_9, %c0_10] : memref<1x128xf32, #tpu.memory_space<vmem>>, vector<1x128xf32>
    %c0_11 = arith.constant 0 : index
    %c0_12 = arith.constant 0 : index
    %c0_13 = arith.constant 0 : index
    %6 = vector.load %arg0[%c0_11, %c0_12, %c0_13] : memref<8x8x32xf32, #tpu.memory_space<vmem>>, vector<8x8x32xf32>
    %7 = vector.shape_cast %6 : vector<8x8x32xf32> to vector<64x32xf32>
    %cst = arith.constant dense<0.000000e+00> : vector<64x128xf32>
    %8 = tpu.matmul %7, %0, %cst {dimension_numbers = #tpu.dot_dimension_numbers<[1], [0], [0], [1], [0, 0, 1, 1], [], []>} : vector<64x32xf32>, vector<32x128xf32>, vector<64x128xf32> -> vector<64x128xf32>
    %9 = vector.broadcast %2 : vector<1x128xf32> to vector<64x128xf32>
    %10 = arith.addf %8, %9 : vector<64x128xf32>
    %11 = vector.shape_cast %10 : vector<64x128xf32> to vector<8x8x128xf32>
    %12 = vector.extract_strided_slice %11 {offsets = [0, 0, 0], sizes = [1, 8, 128], strides = [1, 1, 1]} : vector<8x8x128xf32> to vector<1x8x128xf32>
    %13 = vector.shape_cast %12 : vector<1x8x128xf32> to vector<8x128xf32>
    %14 = arith.negf %13 : vector<8x128xf32>
    %15 = math.exp %14 : vector<8x128xf32>
    %cst_14 = arith.constant 1.000000e+00 : f32
    %16 = vector.broadcast %cst_14 : f32 to vector<8x128xf32>
    %17 = arith.addf %16, %15 : vector<8x128xf32>
    %18 = arith.divf %16, %17 : vector<8x128xf32>
    %19 = math.tanh %13 : vector<8x128xf32>
    %20 = vector.extract_strided_slice %18 {offsets = [0, 0], sizes = [8, 32], strides = [1, 1]} : vector<8x128xf32> to vector<8x32xf32>
    %21 = vector.extract_strided_slice %19 {offsets = [0, 64], sizes = [8, 32], strides = [1, 1]} : vector<8x128xf32> to vector<8x32xf32>
    %22 = vector.extract_strided_slice %18 {offsets = [0, 96], sizes = [8, 32], strides = [1, 1]} : vector<8x128xf32> to vector<8x32xf32>
    %23 = arith.mulf %20, %21 : vector<8x32xf32>
    %24 = math.tanh %23 : vector<8x32xf32>
    %25 = arith.mulf %22, %24 : vector<8x32xf32>
    %26 = vector.extract_strided_slice %11 {offsets = [1, 0, 0], sizes = [1, 8, 128], strides = [1, 1, 1]} : vector<8x8x128xf32> to vector<1x8x128xf32>
    %27 = vector.shape_cast %26 : vector<1x8x128xf32> to vector<8x128xf32>
    %cst_15 = arith.constant dense<0.000000e+00> : vector<8x128xf32>
    %28 = tpu.matmul %25, %1, %cst_15 {dimension_numbers = #tpu.dot_dimension_numbers<[1], [0], [0], [1], [0, 0, 1, 1], [], []>} : vector<8x32xf32>, vector<32x128xf32>, vector<8x128xf32> -> vector<8x128xf32>
    %29 = arith.addf %27, %28 : vector<8x128xf32>
    %30 = arith.negf %29 : vector<8x128xf32>
    %31 = math.exp %30 : vector<8x128xf32>
    %cst_16 = arith.constant 1.000000e+00 : f32
    %32 = vector.broadcast %cst_16 : f32 to vector<8x128xf32>
    %33 = arith.addf %32, %31 : vector<8x128xf32>
    %34 = arith.divf %32, %33 : vector<8x128xf32>
    %35 = math.tanh %29 : vector<8x128xf32>
    %36 = vector.extract_strided_slice %34 {offsets = [0, 0], sizes = [8, 32], strides = [1, 1]} : vector<8x128xf32> to vector<8x32xf32>
    %37 = vector.extract_strided_slice %34 {offsets = [0, 32], sizes = [8, 32], strides = [1, 1]} : vector<8x128xf32> to vector<8x32xf32>
    %38 = vector.extract_strided_slice %35 {offsets = [0, 64], sizes = [8, 32], strides = [1, 1]} : vector<8x128xf32> to vector<8x32xf32>
    %39 = vector.extract_strided_slice %34 {offsets = [0, 96], sizes = [8, 32], strides = [1, 1]} : vector<8x128xf32> to vector<8x32xf32>
    %40 = arith.mulf %37, %23 : vector<8x32xf32>
    %41 = arith.mulf %36, %38 : vector<8x32xf32>
    %42 = arith.addf %40, %41 : vector<8x32xf32>
    %43 = math.tanh %42 : vector<8x32xf32>
    %44 = arith.mulf %39, %43 : vector<8x32xf32>
    %45 = vector.extract_strided_slice %11 {offsets = [2, 0, 0], sizes = [1, 8, 128], strides = [1, 1, 1]} : vector<8x8x128xf32> to vector<1x8x128xf32>
    %46 = vector.shape_cast %45 : vector<1x8x128xf32> to vector<8x128xf32>
    %cst_17 = arith.constant dense<0.000000e+00> : vector<8x128xf32>
    %47 = tpu.matmul %44, %1, %cst_17 {dimension_numbers = #tpu.dot_dimension_numbers<[1], [0], [0], [1], [0, 0, 1, 1], [], []>} : vector<8x32xf32>, vector<32x128xf32>, vector<8x128xf32> -> vector<8x128xf32>
    %48 = arith.addf %46, %47 : vector<8x128xf32>
    %49 = arith.negf %48 : vector<8x128xf32>
    %50 = math.exp %49 : vector<8x128xf32>
    %cst_18 = arith.constant 1.000000e+00 : f32
    %51 = vector.broadcast %cst_18 : f32 to vector<8x128xf32>
    %52 = arith.addf %51, %50 : vector<8x128xf32>
    %53 = arith.divf %51, %52 : vector<8x128xf32>
    %54 = math.tanh %48 : vector<8x128xf32>
    %55 = vector.extract_strided_slice %53 {offsets = [0, 0], sizes = [8, 32], strides = [1, 1]} : vector<8x128xf32> to vector<8x32xf32>
    %56 = vector.extract_strided_slice %53 {offsets = [0, 32], sizes = [8, 32], strides = [1, 1]} : vector<8x128xf32> to vector<8x32xf32>
    %57 = vector.extract_strided_slice %54 {offsets = [0, 64], sizes = [8, 32], strides = [1, 1]} : vector<8x128xf32> to vector<8x32xf32>
    %58 = vector.extract_strided_slice %53 {offsets = [0, 96], sizes = [8, 32], strides = [1, 1]} : vector<8x128xf32> to vector<8x32xf32>
    %59 = arith.mulf %56, %42 : vector<8x32xf32>
    %60 = arith.mulf %55, %57 : vector<8x32xf32>
    %61 = arith.addf %59, %60 : vector<8x32xf32>
    %62 = math.tanh %61 : vector<8x32xf32>
    %63 = arith.mulf %58, %62 : vector<8x32xf32>
    %64 = vector.extract_strided_slice %11 {offsets = [3, 0, 0], sizes = [1, 8, 128], strides = [1, 1, 1]} : vector<8x8x128xf32> to vector<1x8x128xf32>
    %65 = vector.shape_cast %64 : vector<1x8x128xf32> to vector<8x128xf32>
    %cst_19 = arith.constant dense<0.000000e+00> : vector<8x128xf32>
    %66 = tpu.matmul %63, %1, %cst_19 {dimension_numbers = #tpu.dot_dimension_numbers<[1], [0], [0], [1], [0, 0, 1, 1], [], []>} : vector<8x32xf32>, vector<32x128xf32>, vector<8x128xf32> -> vector<8x128xf32>
    %67 = arith.addf %65, %66 : vector<8x128xf32>
    %68 = arith.negf %67 : vector<8x128xf32>
    %69 = math.exp %68 : vector<8x128xf32>
    %cst_20 = arith.constant 1.000000e+00 : f32
    %70 = vector.broadcast %cst_20 : f32 to vector<8x128xf32>
    %71 = arith.addf %70, %69 : vector<8x128xf32>
    %72 = arith.divf %70, %71 : vector<8x128xf32>
    %73 = math.tanh %67 : vector<8x128xf32>
    %74 = vector.extract_strided_slice %72 {offsets = [0, 0], sizes = [8, 32], strides = [1, 1]} : vector<8x128xf32> to vector<8x32xf32>
    %75 = vector.extract_strided_slice %72 {offsets = [0, 32], sizes = [8, 32], strides = [1, 1]} : vector<8x128xf32> to vector<8x32xf32>
    %76 = vector.extract_strided_slice %73 {offsets = [0, 64], sizes = [8, 32], strides = [1, 1]} : vector<8x128xf32> to vector<8x32xf32>
    %77 = vector.extract_strided_slice %72 {offsets = [0, 96], sizes = [8, 32], strides = [1, 1]} : vector<8x128xf32> to vector<8x32xf32>
    %78 = arith.mulf %75, %61 : vector<8x32xf32>
    %79 = arith.mulf %74, %76 : vector<8x32xf32>
    %80 = arith.addf %78, %79 : vector<8x32xf32>
    %81 = math.tanh %80 : vector<8x32xf32>
    %82 = arith.mulf %77, %81 : vector<8x32xf32>
    %83 = vector.extract_strided_slice %11 {offsets = [4, 0, 0], sizes = [1, 8, 128], strides = [1, 1, 1]} : vector<8x8x128xf32> to vector<1x8x128xf32>
    %84 = vector.shape_cast %83 : vector<1x8x128xf32> to vector<8x128xf32>
    %cst_21 = arith.constant dense<0.000000e+00> : vector<8x128xf32>
    %85 = tpu.matmul %82, %1, %cst_21 {dimension_numbers = #tpu.dot_dimension_numbers<[1], [0], [0], [1], [0, 0, 1, 1], [], []>} : vector<8x32xf32>, vector<32x128xf32>, vector<8x128xf32> -> vector<8x128xf32>
    %86 = arith.addf %84, %85 : vector<8x128xf32>
    %87 = arith.negf %86 : vector<8x128xf32>
    %88 = math.exp %87 : vector<8x128xf32>
    %cst_22 = arith.constant 1.000000e+00 : f32
    %89 = vector.broadcast %cst_22 : f32 to vector<8x128xf32>
    %90 = arith.addf %89, %88 : vector<8x128xf32>
    %91 = arith.divf %89, %90 : vector<8x128xf32>
    %92 = math.tanh %86 : vector<8x128xf32>
    %93 = vector.extract_strided_slice %91 {offsets = [0, 0], sizes = [8, 32], strides = [1, 1]} : vector<8x128xf32> to vector<8x32xf32>
    %94 = vector.extract_strided_slice %91 {offsets = [0, 32], sizes = [8, 32], strides = [1, 1]} : vector<8x128xf32> to vector<8x32xf32>
    %95 = vector.extract_strided_slice %92 {offsets = [0, 64], sizes = [8, 32], strides = [1, 1]} : vector<8x128xf32> to vector<8x32xf32>
    %96 = vector.extract_strided_slice %91 {offsets = [0, 96], sizes = [8, 32], strides = [1, 1]} : vector<8x128xf32> to vector<8x32xf32>
    %97 = arith.mulf %94, %80 : vector<8x32xf32>
    %98 = arith.mulf %93, %95 : vector<8x32xf32>
    %99 = arith.addf %97, %98 : vector<8x32xf32>
    %100 = math.tanh %99 : vector<8x32xf32>
    %101 = arith.mulf %96, %100 : vector<8x32xf32>
    %102 = vector.extract_strided_slice %11 {offsets = [5, 0, 0], sizes = [1, 8, 128], strides = [1, 1, 1]} : vector<8x8x128xf32> to vector<1x8x128xf32>
    %103 = vector.shape_cast %102 : vector<1x8x128xf32> to vector<8x128xf32>
    %cst_23 = arith.constant dense<0.000000e+00> : vector<8x128xf32>
    %104 = tpu.matmul %101, %1, %cst_23 {dimension_numbers = #tpu.dot_dimension_numbers<[1], [0], [0], [1], [0, 0, 1, 1], [], []>} : vector<8x32xf32>, vector<32x128xf32>, vector<8x128xf32> -> vector<8x128xf32>
    %105 = arith.addf %103, %104 : vector<8x128xf32>
    %106 = arith.negf %105 : vector<8x128xf32>
    %107 = math.exp %106 : vector<8x128xf32>
    %cst_24 = arith.constant 1.000000e+00 : f32
    %108 = vector.broadcast %cst_24 : f32 to vector<8x128xf32>
    %109 = arith.addf %108, %107 : vector<8x128xf32>
    %110 = arith.divf %108, %109 : vector<8x128xf32>
    %111 = math.tanh %105 : vector<8x128xf32>
    %112 = vector.extract_strided_slice %110 {offsets = [0, 0], sizes = [8, 32], strides = [1, 1]} : vector<8x128xf32> to vector<8x32xf32>
    %113 = vector.extract_strided_slice %110 {offsets = [0, 32], sizes = [8, 32], strides = [1, 1]} : vector<8x128xf32> to vector<8x32xf32>
    %114 = vector.extract_strided_slice %111 {offsets = [0, 64], sizes = [8, 32], strides = [1, 1]} : vector<8x128xf32> to vector<8x32xf32>
    %115 = vector.extract_strided_slice %110 {offsets = [0, 96], sizes = [8, 32], strides = [1, 1]} : vector<8x128xf32> to vector<8x32xf32>
    %116 = arith.mulf %113, %99 : vector<8x32xf32>
    %117 = arith.mulf %112, %114 : vector<8x32xf32>
    %118 = arith.addf %116, %117 : vector<8x32xf32>
    %119 = math.tanh %118 : vector<8x32xf32>
    %120 = arith.mulf %115, %119 : vector<8x32xf32>
    %121 = vector.extract_strided_slice %11 {offsets = [6, 0, 0], sizes = [1, 8, 128], strides = [1, 1, 1]} : vector<8x8x128xf32> to vector<1x8x128xf32>
    %122 = vector.shape_cast %121 : vector<1x8x128xf32> to vector<8x128xf32>
    %cst_25 = arith.constant dense<0.000000e+00> : vector<8x128xf32>
    %123 = tpu.matmul %120, %1, %cst_25 {dimension_numbers = #tpu.dot_dimension_numbers<[1], [0], [0], [1], [0, 0, 1, 1], [], []>} : vector<8x32xf32>, vector<32x128xf32>, vector<8x128xf32> -> vector<8x128xf32>
    %124 = arith.addf %122, %123 : vector<8x128xf32>
    %125 = arith.negf %124 : vector<8x128xf32>
    %126 = math.exp %125 : vector<8x128xf32>
    %cst_26 = arith.constant 1.000000e+00 : f32
    %127 = vector.broadcast %cst_26 : f32 to vector<8x128xf32>
    %128 = arith.addf %127, %126 : vector<8x128xf32>
    %129 = arith.divf %127, %128 : vector<8x128xf32>
    %130 = math.tanh %124 : vector<8x128xf32>
    %131 = vector.extract_strided_slice %129 {offsets = [0, 0], sizes = [8, 32], strides = [1, 1]} : vector<8x128xf32> to vector<8x32xf32>
    %132 = vector.extract_strided_slice %129 {offsets = [0, 32], sizes = [8, 32], strides = [1, 1]} : vector<8x128xf32> to vector<8x32xf32>
    %133 = vector.extract_strided_slice %130 {offsets = [0, 64], sizes = [8, 32], strides = [1, 1]} : vector<8x128xf32> to vector<8x32xf32>
    %134 = vector.extract_strided_slice %129 {offsets = [0, 96], sizes = [8, 32], strides = [1, 1]} : vector<8x128xf32> to vector<8x32xf32>
    %135 = arith.mulf %132, %118 : vector<8x32xf32>
    %136 = arith.mulf %131, %133 : vector<8x32xf32>
    %137 = arith.addf %135, %136 : vector<8x32xf32>
    %138 = math.tanh %137 : vector<8x32xf32>
    %139 = arith.mulf %134, %138 : vector<8x32xf32>
    %140 = vector.extract_strided_slice %11 {offsets = [7, 0, 0], sizes = [1, 8, 128], strides = [1, 1, 1]} : vector<8x8x128xf32> to vector<1x8x128xf32>
    %141 = vector.shape_cast %140 : vector<1x8x128xf32> to vector<8x128xf32>
    %cst_27 = arith.constant dense<0.000000e+00> : vector<8x128xf32>
    %142 = tpu.matmul %139, %1, %cst_27 {dimension_numbers = #tpu.dot_dimension_numbers<[1], [0], [0], [1], [0, 0, 1, 1], [], []>} : vector<8x32xf32>, vector<32x128xf32>, vector<8x128xf32> -> vector<8x128xf32>
    %143 = arith.addf %141, %142 : vector<8x128xf32>
    %144 = arith.negf %143 : vector<8x128xf32>
    %145 = math.exp %144 : vector<8x128xf32>
    %cst_28 = arith.constant 1.000000e+00 : f32
    %146 = vector.broadcast %cst_28 : f32 to vector<8x128xf32>
    %147 = arith.addf %146, %145 : vector<8x128xf32>
    %148 = arith.divf %146, %147 : vector<8x128xf32>
    %149 = math.tanh %143 : vector<8x128xf32>
    %150 = vector.extract_strided_slice %148 {offsets = [0, 0], sizes = [8, 32], strides = [1, 1]} : vector<8x128xf32> to vector<8x32xf32>
    %151 = vector.extract_strided_slice %148 {offsets = [0, 32], sizes = [8, 32], strides = [1, 1]} : vector<8x128xf32> to vector<8x32xf32>
    %152 = vector.extract_strided_slice %149 {offsets = [0, 64], sizes = [8, 32], strides = [1, 1]} : vector<8x128xf32> to vector<8x32xf32>
    %153 = vector.extract_strided_slice %148 {offsets = [0, 96], sizes = [8, 32], strides = [1, 1]} : vector<8x128xf32> to vector<8x32xf32>
    %154 = arith.mulf %151, %137 : vector<8x32xf32>
    %155 = arith.mulf %150, %152 : vector<8x32xf32>
    %156 = arith.addf %154, %155 : vector<8x32xf32>
    %157 = math.tanh %156 : vector<8x32xf32>
    %158 = arith.mulf %153, %157 : vector<8x32xf32>
    %cst_29 = arith.constant dense<0.000000e+00> : vector<8x128xf32>
    %159 = tpu.matmul %158, %3, %cst_29 {dimension_numbers = #tpu.dot_dimension_numbers<[1], [0], [0], [1], [0, 0, 1, 1], [], []>} : vector<8x32xf32>, vector<32x128xf32>, vector<8x128xf32> -> vector<8x128xf32>
    %160 = vector.broadcast %5 : vector<1x128xf32> to vector<8x128xf32>
    %161 = arith.addf %159, %160 : vector<8x128xf32>
    %162 = arith.negf %161 : vector<8x128xf32>
    %163 = math.exp %162 : vector<8x128xf32>
    %cst_30 = arith.constant 1.000000e+00 : f32
    %164 = vector.broadcast %cst_30 : f32 to vector<8x128xf32>
    %165 = arith.addf %164, %163 : vector<8x128xf32>
    %166 = arith.divf %164, %165 : vector<8x128xf32>
    %167 = math.tanh %161 : vector<8x128xf32>
    %168 = vector.extract_strided_slice %166 {offsets = [0, 0], sizes = [8, 32], strides = [1, 1]} : vector<8x128xf32> to vector<8x32xf32>
    %169 = vector.extract_strided_slice %167 {offsets = [0, 64], sizes = [8, 32], strides = [1, 1]} : vector<8x128xf32> to vector<8x32xf32>
    %170 = vector.extract_strided_slice %166 {offsets = [0, 96], sizes = [8, 32], strides = [1, 1]} : vector<8x128xf32> to vector<8x32xf32>
    %171 = arith.mulf %168, %169 : vector<8x32xf32>
    %172 = math.tanh %171 : vector<8x32xf32>
    %173 = arith.mulf %170, %172 : vector<8x32xf32>
    %cst_31 = arith.constant dense<0.000000e+00> : vector<8x128xf32>
    %174 = tpu.matmul %173, %4, %cst_31 {dimension_numbers = #tpu.dot_dimension_numbers<[1], [0], [0], [1], [0, 0, 1, 1], [], []>} : vector<8x32xf32>, vector<32x128xf32>, vector<8x128xf32> -> vector<8x128xf32>
    %175 = arith.addf %161, %174 : vector<8x128xf32>
    %176 = arith.negf %175 : vector<8x128xf32>
    %177 = math.exp %176 : vector<8x128xf32>
    %cst_32 = arith.constant 1.000000e+00 : f32
    %178 = vector.broadcast %cst_32 : f32 to vector<8x128xf32>
    %179 = arith.addf %178, %177 : vector<8x128xf32>
    %180 = arith.divf %178, %179 : vector<8x128xf32>
    %181 = math.tanh %175 : vector<8x128xf32>
    %182 = vector.extract_strided_slice %180 {offsets = [0, 0], sizes = [8, 32], strides = [1, 1]} : vector<8x128xf32> to vector<8x32xf32>
    %183 = vector.extract_strided_slice %180 {offsets = [0, 32], sizes = [8, 32], strides = [1, 1]} : vector<8x128xf32> to vector<8x32xf32>
    %184 = vector.extract_strided_slice %181 {offsets = [0, 64], sizes = [8, 32], strides = [1, 1]} : vector<8x128xf32> to vector<8x32xf32>
    %185 = vector.extract_strided_slice %180 {offsets = [0, 96], sizes = [8, 32], strides = [1, 1]} : vector<8x128xf32> to vector<8x32xf32>
    %186 = arith.mulf %183, %171 : vector<8x32xf32>
    %187 = arith.mulf %182, %184 : vector<8x32xf32>
    %188 = arith.addf %186, %187 : vector<8x32xf32>
    %189 = math.tanh %188 : vector<8x32xf32>
    %190 = arith.mulf %185, %189 : vector<8x32xf32>
    %cst_33 = arith.constant dense<0.000000e+00> : vector<8x128xf32>
    %191 = tpu.matmul %190, %4, %cst_33 {dimension_numbers = #tpu.dot_dimension_numbers<[1], [0], [0], [1], [0, 0, 1, 1], [], []>} : vector<8x32xf32>, vector<32x128xf32>, vector<8x128xf32> -> vector<8x128xf32>
    %192 = arith.addf %161, %191 : vector<8x128xf32>
    %193 = arith.negf %192 : vector<8x128xf32>
    %194 = math.exp %193 : vector<8x128xf32>
    %cst_34 = arith.constant 1.000000e+00 : f32
    %195 = vector.broadcast %cst_34 : f32 to vector<8x128xf32>
    %196 = arith.addf %195, %194 : vector<8x128xf32>
    %197 = arith.divf %195, %196 : vector<8x128xf32>
    %198 = math.tanh %192 : vector<8x128xf32>
    %199 = vector.extract_strided_slice %197 {offsets = [0, 0], sizes = [8, 32], strides = [1, 1]} : vector<8x128xf32> to vector<8x32xf32>
    %200 = vector.extract_strided_slice %197 {offsets = [0, 32], sizes = [8, 32], strides = [1, 1]} : vector<8x128xf32> to vector<8x32xf32>
    %201 = vector.extract_strided_slice %198 {offsets = [0, 64], sizes = [8, 32], strides = [1, 1]} : vector<8x128xf32> to vector<8x32xf32>
    %202 = vector.extract_strided_slice %197 {offsets = [0, 96], sizes = [8, 32], strides = [1, 1]} : vector<8x128xf32> to vector<8x32xf32>
    %203 = arith.mulf %200, %188 : vector<8x32xf32>
    %204 = arith.mulf %199, %201 : vector<8x32xf32>
    %205 = arith.addf %203, %204 : vector<8x32xf32>
    %206 = math.tanh %205 : vector<8x32xf32>
    %207 = arith.mulf %202, %206 : vector<8x32xf32>
    %cst_35 = arith.constant dense<0.000000e+00> : vector<8x128xf32>
    %208 = tpu.matmul %207, %4, %cst_35 {dimension_numbers = #tpu.dot_dimension_numbers<[1], [0], [0], [1], [0, 0, 1, 1], [], []>} : vector<8x32xf32>, vector<32x128xf32>, vector<8x128xf32> -> vector<8x128xf32>
    %209 = arith.addf %161, %208 : vector<8x128xf32>
    %210 = arith.negf %209 : vector<8x128xf32>
    %211 = math.exp %210 : vector<8x128xf32>
    %cst_36 = arith.constant 1.000000e+00 : f32
    %212 = vector.broadcast %cst_36 : f32 to vector<8x128xf32>
    %213 = arith.addf %212, %211 : vector<8x128xf32>
    %214 = arith.divf %212, %213 : vector<8x128xf32>
    %215 = math.tanh %209 : vector<8x128xf32>
    %216 = vector.extract_strided_slice %214 {offsets = [0, 0], sizes = [8, 32], strides = [1, 1]} : vector<8x128xf32> to vector<8x32xf32>
    %217 = vector.extract_strided_slice %214 {offsets = [0, 32], sizes = [8, 32], strides = [1, 1]} : vector<8x128xf32> to vector<8x32xf32>
    %218 = vector.extract_strided_slice %215 {offsets = [0, 64], sizes = [8, 32], strides = [1, 1]} : vector<8x128xf32> to vector<8x32xf32>
    %219 = vector.extract_strided_slice %214 {offsets = [0, 96], sizes = [8, 32], strides = [1, 1]} : vector<8x128xf32> to vector<8x32xf32>
    %220 = arith.mulf %217, %205 : vector<8x32xf32>
    %221 = arith.mulf %216, %218 : vector<8x32xf32>
    %222 = arith.addf %220, %221 : vector<8x32xf32>
    %223 = math.tanh %222 : vector<8x32xf32>
    %224 = arith.mulf %219, %223 : vector<8x32xf32>
    %cst_37 = arith.constant dense<0.000000e+00> : vector<8x128xf32>
    %225 = tpu.matmul %224, %4, %cst_37 {dimension_numbers = #tpu.dot_dimension_numbers<[1], [0], [0], [1], [0, 0, 1, 1], [], []>} : vector<8x32xf32>, vector<32x128xf32>, vector<8x128xf32> -> vector<8x128xf32>
    %226 = arith.addf %161, %225 : vector<8x128xf32>
    %227 = arith.negf %226 : vector<8x128xf32>
    %228 = math.exp %227 : vector<8x128xf32>
    %cst_38 = arith.constant 1.000000e+00 : f32
    %229 = vector.broadcast %cst_38 : f32 to vector<8x128xf32>
    %230 = arith.addf %229, %228 : vector<8x128xf32>
    %231 = arith.divf %229, %230 : vector<8x128xf32>
    %232 = math.tanh %226 : vector<8x128xf32>
    %233 = vector.extract_strided_slice %231 {offsets = [0, 0], sizes = [8, 32], strides = [1, 1]} : vector<8x128xf32> to vector<8x32xf32>
    %234 = vector.extract_strided_slice %231 {offsets = [0, 32], sizes = [8, 32], strides = [1, 1]} : vector<8x128xf32> to vector<8x32xf32>
    %235 = vector.extract_strided_slice %232 {offsets = [0, 64], sizes = [8, 32], strides = [1, 1]} : vector<8x128xf32> to vector<8x32xf32>
    %236 = vector.extract_strided_slice %231 {offsets = [0, 96], sizes = [8, 32], strides = [1, 1]} : vector<8x128xf32> to vector<8x32xf32>
    %237 = arith.mulf %234, %222 : vector<8x32xf32>
    %238 = arith.mulf %233, %235 : vector<8x32xf32>
    %239 = arith.addf %237, %238 : vector<8x32xf32>
    %240 = math.tanh %239 : vector<8x32xf32>
    %241 = arith.mulf %236, %240 : vector<8x32xf32>
    %cst_39 = arith.constant dense<0.000000e+00> : vector<8x128xf32>
    %242 = tpu.matmul %241, %4, %cst_39 {dimension_numbers = #tpu.dot_dimension_numbers<[1], [0], [0], [1], [0, 0, 1, 1], [], []>} : vector<8x32xf32>, vector<32x128xf32>, vector<8x128xf32> -> vector<8x128xf32>
    %243 = arith.addf %161, %242 : vector<8x128xf32>
    %244 = arith.negf %243 : vector<8x128xf32>
    %245 = math.exp %244 : vector<8x128xf32>
    %cst_40 = arith.constant 1.000000e+00 : f32
    %246 = vector.broadcast %cst_40 : f32 to vector<8x128xf32>
    %247 = arith.addf %246, %245 : vector<8x128xf32>
    %248 = arith.divf %246, %247 : vector<8x128xf32>
    %249 = math.tanh %243 : vector<8x128xf32>
    %250 = vector.extract_strided_slice %248 {offsets = [0, 0], sizes = [8, 32], strides = [1, 1]} : vector<8x128xf32> to vector<8x32xf32>
    %251 = vector.extract_strided_slice %248 {offsets = [0, 32], sizes = [8, 32], strides = [1, 1]} : vector<8x128xf32> to vector<8x32xf32>
    %252 = vector.extract_strided_slice %249 {offsets = [0, 64], sizes = [8, 32], strides = [1, 1]} : vector<8x128xf32> to vector<8x32xf32>
    %253 = vector.extract_strided_slice %248 {offsets = [0, 96], sizes = [8, 32], strides = [1, 1]} : vector<8x128xf32> to vector<8x32xf32>
    %254 = arith.mulf %251, %239 : vector<8x32xf32>
    %255 = arith.mulf %250, %252 : vector<8x32xf32>
    %256 = arith.addf %254, %255 : vector<8x32xf32>
    %257 = math.tanh %256 : vector<8x32xf32>
    %258 = arith.mulf %253, %257 : vector<8x32xf32>
    %cst_41 = arith.constant dense<0.000000e+00> : vector<8x128xf32>
    %259 = tpu.matmul %258, %4, %cst_41 {dimension_numbers = #tpu.dot_dimension_numbers<[1], [0], [0], [1], [0, 0, 1, 1], [], []>} : vector<8x32xf32>, vector<32x128xf32>, vector<8x128xf32> -> vector<8x128xf32>
    %260 = arith.addf %161, %259 : vector<8x128xf32>
    %261 = arith.negf %260 : vector<8x128xf32>
    %262 = math.exp %261 : vector<8x128xf32>
    %cst_42 = arith.constant 1.000000e+00 : f32
    %263 = vector.broadcast %cst_42 : f32 to vector<8x128xf32>
    %264 = arith.addf %263, %262 : vector<8x128xf32>
    %265 = arith.divf %263, %264 : vector<8x128xf32>
    %266 = math.tanh %260 : vector<8x128xf32>
    %267 = vector.extract_strided_slice %265 {offsets = [0, 0], sizes = [8, 32], strides = [1, 1]} : vector<8x128xf32> to vector<8x32xf32>
    %268 = vector.extract_strided_slice %265 {offsets = [0, 32], sizes = [8, 32], strides = [1, 1]} : vector<8x128xf32> to vector<8x32xf32>
    %269 = vector.extract_strided_slice %266 {offsets = [0, 64], sizes = [8, 32], strides = [1, 1]} : vector<8x128xf32> to vector<8x32xf32>
    %270 = vector.extract_strided_slice %265 {offsets = [0, 96], sizes = [8, 32], strides = [1, 1]} : vector<8x128xf32> to vector<8x32xf32>
    %271 = arith.mulf %268, %256 : vector<8x32xf32>
    %272 = arith.mulf %267, %269 : vector<8x32xf32>
    %273 = arith.addf %271, %272 : vector<8x32xf32>
    %274 = math.tanh %273 : vector<8x32xf32>
    %275 = arith.mulf %270, %274 : vector<8x32xf32>
    %cst_43 = arith.constant dense<0.000000e+00> : vector<8x128xf32>
    %276 = tpu.matmul %275, %4, %cst_43 {dimension_numbers = #tpu.dot_dimension_numbers<[1], [0], [0], [1], [0, 0, 1, 1], [], []>} : vector<8x32xf32>, vector<32x128xf32>, vector<8x128xf32> -> vector<8x128xf32>
    %277 = arith.addf %161, %276 : vector<8x128xf32>
    %278 = arith.negf %277 : vector<8x128xf32>
    %279 = math.exp %278 : vector<8x128xf32>
    %cst_44 = arith.constant 1.000000e+00 : f32
    %280 = vector.broadcast %cst_44 : f32 to vector<8x128xf32>
    %281 = arith.addf %280, %279 : vector<8x128xf32>
    %282 = arith.divf %280, %281 : vector<8x128xf32>
    %283 = math.tanh %277 : vector<8x128xf32>
    %284 = vector.extract_strided_slice %282 {offsets = [0, 0], sizes = [8, 32], strides = [1, 1]} : vector<8x128xf32> to vector<8x32xf32>
    %285 = vector.extract_strided_slice %282 {offsets = [0, 32], sizes = [8, 32], strides = [1, 1]} : vector<8x128xf32> to vector<8x32xf32>
    %286 = vector.extract_strided_slice %283 {offsets = [0, 64], sizes = [8, 32], strides = [1, 1]} : vector<8x128xf32> to vector<8x32xf32>
    %287 = vector.extract_strided_slice %282 {offsets = [0, 96], sizes = [8, 32], strides = [1, 1]} : vector<8x128xf32> to vector<8x32xf32>
    %288 = arith.mulf %285, %273 : vector<8x32xf32>
    %289 = arith.mulf %284, %286 : vector<8x32xf32>
    %290 = arith.addf %288, %289 : vector<8x32xf32>
    %291 = math.tanh %290 : vector<8x32xf32>
    %292 = arith.mulf %287, %291 : vector<8x32xf32>
    %293 = tpu.concatenate %173, %190, %207, %224, %241, %258, %275, %292 in 0 : vector<8x32xf32>, vector<8x32xf32>, vector<8x32xf32>, vector<8x32xf32>, vector<8x32xf32>, vector<8x32xf32>, vector<8x32xf32>, vector<8x32xf32> -> vector<64x32xf32>
    %c0_45 = arith.constant 0 : index
    %c0_46 = arith.constant 0 : index
    %294 = vector.load %arg7[%c0_45, %c0_46] : memref<32x128xf32, #tpu.memory_space<vmem>>, vector<32x128xf32>
    %cst_47 = arith.constant dense<0.000000e+00> : vector<64x128xf32>
    %295 = tpu.matmul %293, %294, %cst_47 {dimension_numbers = #tpu.dot_dimension_numbers<[1], [0], [0], [1], [0, 0, 1, 1], [], []>} : vector<64x32xf32>, vector<32x128xf32>, vector<64x128xf32> -> vector<64x128xf32>
    %c0_48 = arith.constant 0 : index
    %c0_49 = arith.constant 0 : index
    %296 = vector.load %arg8[%c0_48, %c0_49] : memref<1x128xf32, #tpu.memory_space<vmem>>, vector<1x128xf32>
    %297 = vector.broadcast %296 : vector<1x128xf32> to vector<64x128xf32>
    %298 = arith.addf %295, %297 : vector<64x128xf32>
    %299 = vector.shape_cast %298 : vector<64x128xf32> to vector<8x8x128xf32>
    %c0_50 = arith.constant 0 : index
    %c0_51 = arith.constant 0 : index
    %c0_52 = arith.constant 0 : index
    %300 = vector.load %arg9[%c0_50, %c0_51, %c0_52] : memref<8x8x128xf32, #tpu.memory_space<vmem>>, vector<8x8x128xf32>
    tpu.vector_store %arg9[%c0_50, %c0_51, %c0_52], %299 {strides = array<i32>} : memref<8x8x128xf32, #tpu.memory_space<vmem>>, vector<8x8x128xf32>,
    return
  }
}

</mosaic_0001>

<llo_original>
// kernel: tpu_custom_call.1
$region0: #{tpu_custom_call.1}
  #allocation0 [shape = 'u32[]', space=smem, size = 0x4, offset = 0x4, fixed_abs, tag = 'smem constant byte address 0x4 - core index']
  #allocation1 [shape = 'u32[144,128]{1,0:T(1,128)}', space=vmem, size = 0x12000, scoped, tag = 'internal scratch']
  %s0 = inlined_call_operand.hbm [shape: f32[8,8,32], index: 0, kind: input, shape index: {}]
  %s1 = inlined_call_operand.hbm [shape: f32[32,128], index: 1, kind: input, shape index: {}]
  %s2 = inlined_call_operand.hbm [shape: f32[32,128], index: 2, kind: input, shape index: {}]
  %s3 = inlined_call_operand.vmem [shape: f32[1,128], index: 3, kind: input, shape index: {}]
  %s4 = inlined_call_operand.hbm [shape: f32[32,128], index: 4, kind: input, shape index: {}]
  %s5 = inlined_call_operand.hbm [shape: f32[32,128], index: 5, kind: input, shape index: {}]
  %s6 = inlined_call_operand.vmem [shape: f32[1,128], index: 6, kind: input, shape index: {}]
  %s7 = inlined_call_operand.hbm [shape: f32[32,128], index: 7, kind: input, shape index: {}]
  %s8 = inlined_call_operand.vmem [shape: f32[1,128], index: 8, kind: input, shape index: {}]
  %s9 = inlined_call_operand.hbm [shape: f32[8,8,128], index: 9, kind: output, shape index: {}]
  %s10 = sld [smem:[#allocation0]]
  $region70: #{tpu_custom_call.1} parent=0
    _
  %s12 = ssub.s32 1, %s10
  %s13 = scalar_select 0, %s12, %s10
  $region1: #{tpu_custom_call.1} parent=0
    #allocation2 [shape = 'u8[32768]{0}', space=vmem, size = 0x8000, scoped, tag = 'input window, operand 0, single buffered']
    #allocation3 [shape = 's32[1]{0}', space=sflag, size = 0x4, scoped, tag = 'scoped memory for tpu_custom_call.1']
    #allocation4 [shape = 's32[1]{0}', space=sflag, size = 0x4, scoped, tag = 'scoped memory for tpu_custom_call.1']
    #allocation5 [shape = 'u8[16384]{0}', space=vmem, size = 0x4000, scoped, tag = 'input window, operand 1, single buffered']
    #allocation6 [shape = 's32[1]{0}', space=sflag, size = 0x4, scoped, tag = 'scoped memory for tpu_custom_call.1']
    #allocation7 [shape = 'u8[16384]{0}', space=vmem, size = 0x4000, scoped, tag = 'input window, operand 2, single buffered']
    #allocation8 [shape = 'u8[16384]{0}', space=vmem, size = 0x4000, scoped, tag = 'input window, operand 4, single buffered']
    #allocation9 [shape = 's32[1]{0}', space=sflag, size = 0x4, scoped, tag = 'scoped memory for tpu_custom_call.1']
    #allocation10 [shape = 'u8[16384]{0}', space=vmem, size = 0x4000, scoped, tag = 'input window, operand 5, single buffered']
    #allocation11 [shape = 'u8[16384]{0}', space=vmem, size = 0x4000, scoped, tag = 'input window, operand 7, single buffered']
    #allocation12 [shape = 's32[1]{0}', space=sflag, size = 0x4, scoped, tag = 'scoped memory for tpu_custom_call.1']
    #allocation13 [shape = 'u8[32768]{0}', space=vmem, size = 0x8000, scoped, tag = 'output window, operand 0, single buffered']
    %14 = vsyncpa [#allocation3], 0
    %15 = vsyncpa [#allocation6], 0
    %16 = vsyncpa [#allocation9], 0
    %17 = vsyncpa [#allocation12], 0
    %18 = vsyncpa [#allocation4], 0
    // Predicated region
    $region2: #{tpu_custom_call.1} parent=1 // pred_check
      _
    $region3: #{tpu_custom_call.1} parent=1 // pred_check_branch
      %20 = sbr.rel (0) target = $region5
    $region4: #{tpu_custom_call.1} parent=1 // pred_region
      %s22 = ssub.s32 1024, 1024
      %23 = vsyncadd [#allocation3], %s22
      %s24 = sshll.u32 [#allocation2], 4
      %s25 = int_to_ptr.vmem [resolvable:$true] %s24
      %30 = dma.hbm_to_vmem [thread:$0]  %s0, 1024, %s25, [#allocation3], 128, 128, 8
    $region5: #{tpu_custom_call.1} parent=1 // pred_fallthru
      _
    // Predicated region
    $region6: #{tpu_custom_call.1} parent=1 // pred_check
      _
    $region7: #{tpu_custom_call.1} parent=1 // pred_check_branch
      %32 = sbr.rel (0) target = $region9
    $region8: #{tpu_custom_call.1} parent=1 // pred_region
      %s34 = ssub.s32 512, 512
      %35 = vsyncadd [#allocation6], %s34
      %s36 = sshll.u32 [#allocation5], 4
      %s37 = int_to_ptr.vmem [resolvable:$true] %s36
      %42 = dma.hbm_to_vmem [thread:$0]  %s1, 512, %s37, [#allocation6], 128, 128, 8
    $region9: #{tpu_custom_call.1} parent=1 // pred_fallthru
      _
    // Predicated region
    $region10: #{tpu_custom_call.1} parent=1 // pred_check
      _
    $region11: #{tpu_custom_call.1} parent=1 // pred_check_branch
      %44 = sbr.rel (0) target = $region13
    $region12: #{tpu_custom_call.1} parent=1 // pred_region
      %s46 = ssub.s32 512, 512
      %47 = vsyncadd [#allocation6], %s46
      %s48 = sshll.u32 [#allocation7], 4
      %s49 = int_to_ptr.vmem [resolvable:$true] %s48
      %54 = dma.hbm_to_vmem [thread:$0]  %s2, 512, %s49, [#allocation6], 128, 128, 8
    $region13: #{tpu_custom_call.1} parent=1 // pred_fallthru
      _
    // Predicated region
    $region14: #{tpu_custom_call.1} parent=1 // pred_check
      _
    $region15: #{tpu_custom_call.1} parent=1 // pred_check_branch
      %56 = sbr.rel (0) target = $region17
    $region16: #{tpu_custom_call.1} parent=1 // pred_region
      _
    $region17: #{tpu_custom_call.1} parent=1 // pred_fallthru
      _
    // Predicated region
    $region18: #{tpu_custom_call.1} parent=1 // pred_check
      _
    $region19: #{tpu_custom_call.1} parent=1 // pred_check_branch
      %58 = sbr.rel (0) target = $region21
    $region20: #{tpu_custom_call.1} parent=1 // pred_region
      %s60 = ssub.s32 512, 512
      %61 = vsyncadd [#allocation9], %s60
      %s62 = sshll.u32 [#allocation8], 4
      %s63 = int_to_ptr.vmem [resolvable:$true] %s62
      %68 = dma.hbm_to_vmem [thread:$0]  %s4, 512, %s63, [#allocation9], 128, 128, 8
    $region21: #{tpu_custom_call.1} parent=1 // pred_fallthru
      _
    // Predicated region
    $region22: #{tpu_custom_call.1} parent=1 // pred_check
      _
    $region23: #{tpu_custom_call.1} parent=1 // pred_check_branch
      %70 = sbr.rel (0) target = $region25
    $region24: #{tpu_custom_call.1} parent=1 // pred_region
      %s72 = ssub.s32 512, 512
      %73 = vsyncadd [#allocation9], %s72
      %s74 = sshll.u32 [#allocation10], 4
      %s75 = int_to_ptr.vmem [resolvable:$true] %s74
      %80 = dma.hbm_to_vmem [thread:$0]  %s5, 512, %s75, [#allocation9], 128, 128, 8
    $region25: #{tpu_custom_call.1} parent=1 // pred_fallthru
      _
    // Predicated region
    $region26: #{tpu_custom_call.1} parent=1 // pred_check
      _
    $region27: #{tpu_custom_call.1} parent=1 // pred_check_branch
      %82 = sbr.rel (0) target = $region29
    $region28: #{tpu_custom_call.1} parent=1 // pred_region
      _
    $region29: #{tpu_custom_call.1} parent=1 // pred_fallthru
      _
    // Predicated region
    $region30: #{tpu_custom_call.1} parent=1 // pred_check
      _
    $region31: #{tpu_custom_call.1} parent=1 // pred_check_branch
      %84 = sbr.rel (0) target = $region33
    $region32: #{tpu_custom_call.1} parent=1 // pred_region
      %s86 = ssub.s32 512, 512
      %87 = vsyncadd [#allocation12], %s86
      %s88 = sshll.u32 [#allocation11], 4
      %s89 = int_to_ptr.vmem [resolvable:$true] %s88
      %94 = dma.hbm_to_vmem [thread:$0]  %s7, 512, %s89, [#allocation12], 128, 128, 8
    $region33: #{tpu_custom_call.1} parent=1 // pred_fallthru
      _
    // Predicated region
    $region34: #{tpu_custom_call.1} parent=1 // pred_check
      _
    $region35: #{tpu_custom_call.1} parent=1 // pred_check_branch
      %96 = sbr.rel (0) target = $region37
    $region36: #{tpu_custom_call.1} parent=1 // pred_region
      _
    $region37: #{tpu_custom_call.1} parent=1 // pred_fallthru
      _
    // Predicated region
    $region38: #{tpu_custom_call.1} parent=1 // pred_check
      _
    $region39: #{tpu_custom_call.1} parent=1 // pred_check_branch
      %98 = sbr.rel (0) target = $region41
    $region40: #{tpu_custom_call.1} parent=1 // pred_region
      %99 = dma.done [#allocation3], 1024
    $region41: #{tpu_custom_call.1} parent=1 // pred_fallthru
      _
    // Predicated region
    $region42: #{tpu_custom_call.1} parent=1 // pred_check
      _
    $region43: #{tpu_custom_call.1} parent=1 // pred_check_branch
      %101 = sbr.rel (0) target = $region45
    $region44: #{tpu_custom_call.1} parent=1 // pred_region
      %102 = dma.done [#allocation6], 512
    $region45: #{tpu_custom_call.1} parent=1 // pred_fallthru
      _
    // Predicated region
    $region46: #{tpu_custom_call.1} parent=1 // pred_check
      _
    $region47: #{tpu_custom_call.1} parent=1 // pred_check_branch
      %104 = sbr.rel (0) target = $region49
    $region48: #{tpu_custom_call.1} parent=1 // pred_region
      %105 = dma.done [#allocation6], 512
    $region49: #{tpu_custom_call.1} parent=1 // pred_fallthru
      _
    // Predicated region
    $region50: #{tpu_custom_call.1} parent=1 // pred_check
      _
    $region51: #{tpu_custom_call.1} parent=1 // pred_check_branch
      %107 = sbr.rel (0) target = $region53
    $region52: #{tpu_custom_call.1} parent=1 // pred_region
      %108 = dma.done [#allocation9], 512
    $region53: #{tpu_custom_call.1} parent=1 // pred_fallthru
      _
    // Predicated region
    $region54: #{tpu_custom_call.1} parent=1 // pred_check
      _
    $region55: #{tpu_custom_call.1} parent=1 // pred_check_branch
      %110 = sbr.rel (0) target = $region57
    $region56: #{tpu_custom_call.1} parent=1 // pred_region
      %111 = dma.done [#allocation9], 512
    $region57: #{tpu_custom_call.1} parent=1 // pred_fallthru
      _
    // Predicated region
    $region58: #{tpu_custom_call.1} parent=1 // pred_check
      _
    $region59: #{tpu_custom_call.1} parent=1 // pred_check_branch
      %113 = sbr.rel (0) target = $region61
    $region60: #{tpu_custom_call.1} parent=1 // pred_region
      %114 = dma.done [#allocation12], 512
    $region61: #{tpu_custom_call.1} parent=1 // pred_fallthru
      _
    %v115 = vld [vmem:[#allocation5] sm:$0xff]
    %v116 = vld [vmem:[#allocation5 + $0x8] sm:$0xff]
    %v117 = vld [vmem:[#allocation5 + $0x10] sm:$0xff]
    %v118 = vld [vmem:[#allocation5 + $0x18] sm:$0xff]
    %v119 = vld [vmem:[#allocation7] sm:$0xff]
    %v120 = vld [vmem:[#allocation7 + $0x8] sm:$0xff]
    %v121 = vld [vmem:[#allocation7 + $0x10] sm:$0xff]
    %v122 = vld [vmem:[#allocation7 + $0x18] sm:$0xff]
    %v123 = vld [vmem:[%s3] sm:$0x1]
    %v124 = vld [vmem:[#allocation8] sm:$0xff]
    %v125 = vld [vmem:[#allocation8 + $0x8] sm:$0xff]
    %v126 = vld [vmem:[#allocation8 + $0x10] sm:$0xff]
    %v127 = vld [vmem:[#allocation8 + $0x18] sm:$0xff]
    %v128 = vld [vmem:[#allocation10] sm:$0xff]
    %v129 = vld [vmem:[#allocation10 + $0x8] sm:$0xff]
    %v130 = vld [vmem:[#allocation10 + $0x10] sm:$0xff]
    %v131 = vld [vmem:[#allocation10 + $0x18] sm:$0xff]
    %v132 = vld [vmem:[%s6] sm:$0x1]
    %v133 = vld [vmem:[#allocation2] sm:$0xff]
    %v134 = vld [vmem:[#allocation2 + $0x8] sm:$0xff]
    %v135 = vld [vmem:[#allocation2 + $0x10] sm:$0xff]
    %v136 = vld [vmem:[#allocation2 + $0x18] sm:$0xff]
    %v137 = vld [vmem:[#allocation2 + $0x20] sm:$0xff]
    %v138 = vld [vmem:[#allocation2 + $0x28] sm:$0xff]
    %v139 = vld [vmem:[#allocation2 + $0x30] sm:$0xff]
    %v140 = vld [vmem:[#allocation2 + $0x38] sm:$0xff]
    %v142 = vlaneseq
    %v143 = vshrl.u32 %v142, 7
    %v144 = vsub.s32 0, %v143
    %v145 = vrot.slane %v123, %v144
    %vm147 = vcmask 261120
    %v149 = vsel %vm147, %v133, 0
    %v152 = vsel %vm147, %v134, 0
    %v155 = vsel %vm147, %v135, 0
    %v158 = vsel %vm147, %v136, 0
    %v161 = vsel %vm147, %v137, 0
    %v164 = vsel %vm147, %v138, 0
    %v167 = vsel %vm147, %v139, 0
    %v170 = vsel %vm147, %v140, 0
    %172 = vmatprep.subr.mxu0 0.0
    %173 = vmatpush1.msra.mxu0 %v115
    %174 = vmatprep.subr.mxu0 0.0
    %175 = vmatpush1.msra.mxu0 %v116
    %176 = vmatprep.subr.mxu0 0.0
    %177 = vmatpush1.msra.mxu0 %v117
    %178 = vmatprep.subr.mxu0 0.0
    %179 = vmatpush1.msra.mxu0 %v118
    %180 = vmatprep.subr.mxu0 0.0
    %181 = vmatpush1.msra.mxu0 0.0
    %182 = vmatprep.subr.mxu0 0.0
    %183 = vmatpush1.msra.mxu0 0.0
    %184 = vmatprep.subr.mxu0 0.0
    %185 = vmatpush1.msra.mxu0 0.0
    %186 = vmatprep.subr.mxu0 0.0
    %187 = vmatpush1.msra.mxu0 0.0
    %188 = vmatprep.subr.mxu0 0.0
    %189 = vmatpush1.msra.mxu0 0.0
    %190 = vmatprep.subr.mxu0 0.0
    %191 = vmatpush1.msra.mxu0 0.0
    %192 = vmatprep.subr.mxu0 0.0
    %193 = vmatpush1.msra.mxu0 0.0
    %194 = vmatprep.subr.mxu0 0.0
    %195 = vmatpush1.msra.mxu0 0.0
    %196 = vmatprep.subr.mxu0 0.0
    %197 = vmatpush1.msra.mxu0 0.0
    %198 = vmatprep.subr.mxu0 0.0
    %199 = vmatpush1.msra.mxu0 0.0
    %200 = vmatprep.subr.mxu0 0.0
    %201 = vmatpush1.msra.mxu0 0.0
    %202 = vmatprep.subr.mxu0 0.0
    %203 = vmatpush1.msra.mxu0 0.0
    %204 = vmatprep.subr.mxu0 0.0
    %205 = vmatpush1.msra.mxu0 0.0
    %206 = vmatprep.subr.mxu0 0.0
    %207 = vmatpush1.msra.mxu0 0.0
    %208 = vmatprep.subr.mxu0 0.0
    %209 = vmatpush1.msra.mxu0 0.0
    %210 = vmatprep.subr.mxu0 0.0
    %211 = vmatpush1.msra.mxu0 0.0
    %212 = vmatprep.subr.mxu0 0.0
    %213 = vmatpush1.msra.mxu0 0.0
    %214 = vmatprep.subr.mxu0 0.0
    %215 = vmatpush1.msra.mxu0 0.0
    %216 = vmatprep.subr.mxu0 0.0
    %217 = vmatpush1.msra.mxu0 0.0
    %218 = vmatprep.subr.mxu0 0.0
    %219 = vmatpush1.msra.mxu0 0.0
    %220 = vmatprep.subr.mxu0 0.0
    %221 = vmatpush1.msra.mxu0 0.0
    %222 = vmatprep.subr.mxu0 0.0
    %223 = vmatpush1.msra.mxu0 0.0
    %224 = vmatprep.subr.mxu0 0.0
    %225 = vmatpush1.msra.mxu0 0.0
    %226 = vmatprep.subr.mxu0 0.0
    %227 = vmatpush1.msra.mxu0 0.0
    %228 = vmatprep.subr.mxu0 0.0
    %229 = vmatpush1.msra.mxu0 0.0
    %230 = vmatprep.subr.mxu0 0.0
    %231 = vmatpush1.msra.mxu0 0.0
    %232 = vmatprep.subr.mxu0 0.0
    %233 = vmatpush1.msra.mxu0 0.0
    %234 = vmatprep.subr.mxu0 0.0
    %235 = vmatpush1.msra.mxu0 0.0
    %236 = vmatprep.mubr.f32.mxu0 0.0
    %237 = vmatmul.mubr.f32.gmra.mrb[0].mxu0 %v149
    %v238 = vpop.f32.mrb[0].mxu0
    %v239 = vadd.f32 %v145, %v238
    %v240 = vpop.f32.mrb[0].mxu0
    %241 = vmatprep.mubr.f32.mxu0 0.0
    %242 = vmatmul.mubr.f32.gmra.mrb[0].mxu0 %v152
    %v243 = vpop.f32.mrb[0].mxu0
    %v244 = vadd.f32 %v145, %v243
    %v245 = vpop.f32.mrb[0].mxu0
    %246 = vmatprep.mubr.f32.mxu0 0.0
    %247 = vmatmul.mubr.f32.gmra.mrb[0].mxu0 %v155
    %v248 = vpop.f32.mrb[0].mxu0
    %v249 = vadd.f32 %v145, %v248
    %v250 = vpop.f32.mrb[0].mxu0
    %251 = vmatprep.mubr.f32.mxu0 0.0
    %252 = vmatmul.mubr.f32.gmra.mrb[0].mxu0 %v158
    %v253 = vpop.f32.mrb[0].mxu0
    %v254 = vadd.f32 %v145, %v253
    %v255 = vpop.f32.mrb[0].mxu0
    %256 = vmatprep.mubr.f32.mxu0 0.0
    %257 = vmatmul.mubr.f32.gmra.mrb[0].mxu0 %v161
    %v258 = vpop.f32.mrb[0].mxu0
    %v259 = vadd.f32 %v145, %v258
    %v260 = vpop.f32.mrb[0].mxu0
    %261 = vmatprep.mubr.f32.mxu0 0.0
    %262 = vmatmul.mubr.f32.gmra.mrb[0].mxu0 %v164
    %v263 = vpop.f32.mrb[0].mxu0
    %v264 = vadd.f32 %v145, %v263
    %v265 = vpop.f32.mrb[0].mxu0
    %266 = vmatprep.mubr.f32.mxu0 0.0
    %267 = vmatmul.mubr.f32.gmra.mrb[0].mxu0 %v167
    %v268 = vpop.f32.mrb[0].mxu0
    %v269 = vadd.f32 %v145, %v268
    %v270 = vpop.f32.mrb[0].mxu0
    %271 = vmatprep.mubr.f32.mxu0 0.0
    %272 = vmatmul.mubr.f32.gmra.mrb[0].mxu0 %v170
    %v273 = vpop.f32.mrb[0].mxu0
    %v274 = vadd.f32 %v145, %v273
    %v275 = vpop.f32.mrb[0].mxu0
    %276 = vdwg.mxu0
    %v277 = vxor.u32 %v239, 2147483648
    %v278 = vmul.f32 %v277, 1.442695
    %v279 = vpow.pop %v278
    %v280 = vadd.f32 %v279, 1.0
    %v281 = vrcp.pop %v280
    %v282 = vmul.f32 1.0, %v281
    %v283 = vtanh.pop %v239
    %285 = vrot.lane.b32.xlu0 %v283, 64
    %v286 = vpop.permute.xlu0 %285
    %v288 = vmul.f32 %v282, %v286
    %v289 = vtanh.pop %v288
    %291 = vrot.lane.b32.xlu0 %v289, 96
    %v292 = vpop.permute.xlu0 %291
    %v294 = vmul.f32 %v282, %v292
    %296 = vrot.lane.b32.xlu0 %v294, 32
    %v297 = vpop.permute.xlu0 %296
    %v298 = vsel %vm147, %v297, 0
    %300 = vmatprep.subr.mxu0 0.0
    %301 = vmatpush1.msra.mxu0 %v119
    %302 = vmatprep.subr.mxu0 0.0
    %303 = vmatpush1.msra.mxu0 %v120
    %304 = vmatprep.subr.mxu0 0.0
    %305 = vmatpush1.msra.mxu0 %v121
    %306 = vmatprep.subr.mxu0 0.0
    %307 = vmatpush1.msra.mxu0 %v122
    %308 = vmatprep.subr.mxu0 0.0
    %309 = vmatpush1.msra.mxu0 0.0
    %310 = vmatprep.subr.mxu0 0.0
    %311 = vmatpush1.msra.mxu0 0.0
    %312 = vmatprep.subr.mxu0 0.0
    %313 = vmatpush1.msra.mxu0 0.0
    %314 = vmatprep.subr.mxu0 0.0
    %315 = vmatpush1.msra.mxu0 0.0
    %316 = vmatprep.subr.mxu0 0.0
    %317 = vmatpush1.msra.mxu0 0.0
    %318 = vmatprep.subr.mxu0 0.0
    %319 = vmatpush1.msra.mxu0 0.0
    %320 = vmatprep.subr.mxu0 0.0
    %321 = vmatpush1.msra.mxu0 0.0
    %322 = vmatprep.subr.mxu0 0.0
    %323 = vmatpush1.msra.mxu0 0.0
    %324 = vmatprep.subr.mxu0 0.0
    %325 = vmatpush1.msra.mxu0 0.0
    %326 = vmatprep.subr.mxu0 0.0
    %327 = vmatpush1.msra.mxu0 0.0
    %328 = vmatprep.subr.mxu0 0.0
    %329 = vmatpush1.msra.mxu0 0.0
    %330 = vmatprep.subr.mxu0 0.0
    %331 = vmatpush1.msra.mxu0 0.0
    %332 = vmatprep.subr.mxu0 0.0
    %333 = vmatpush1.msra.mxu0 0.0
    %334 = vmatprep.subr.mxu0 0.0
    %335 = vmatpush1.msra.mxu0 0.0
    %336 = vmatprep.subr.mxu0 0.0
    %337 = vmatpush1.msra.mxu0 0.0
    %338 = vmatprep.subr.mxu0 0.0
    %339 = vmatpush1.msra.mxu0 0.0
    %340 = vmatprep.subr.mxu0 0.0
    %341 = vmatpush1.msra.mxu0 0.0
    %342 = vmatprep.subr.mxu0 0.0
    %343 = vmatpush1.msra.mxu0 0.0
    %344 = vmatprep.subr.mxu0 0.0
    %345 = vmatpush1.msra.mxu0 0.0
    %346 = vmatprep.subr.mxu0 0.0
    %347 = vmatpush1.msra.mxu0 0.0
    %348 = vmatprep.subr.mxu0 0.0
    %349 = vmatpush1.msra.mxu0 0.0
    %350 = vmatprep.subr.mxu0 0.0
    %351 = vmatpush1.msra.mxu0 0.0
    %352 = vmatprep.subr.mxu0 0.0
    %353 = vmatpush1.msra.mxu0 0.0
    %354 = vmatprep.subr.mxu0 0.0
    %355 = vmatpush1.msra.mxu0 0.0
    %356 = vmatprep.subr.mxu0 0.0
    %357 = vmatpush1.msra.mxu0 0.0
    %358 = vmatprep.subr.mxu0 0.0
    %359 = vmatpush1.msra.mxu0 0.0
    %360 = vmatprep.subr.mxu0 0.0
    %361 = vmatpush1.msra.mxu0 0.0
    %362 = vmatprep.subr.mxu0 0.0
    %363 = vmatpush1.msra.mxu0 0.0
    %364 = vmatprep.mubr.f32.mxu0 0.0
    %365 = vmatmul.mubr.f32.gmra.mrb[0].mxu0 %v298
    %v366 = vpop.f32.mrb[0].mxu0
    %v367 = vadd.f32 0.0, %v366
    %v368 = vpop.f32.mrb[0].mxu0
    %369 = vdwg.mxu0
    %v370 = vadd.f32 %v244, %v367
    %v371 = vxor.u32 %v370, 2147483648
    %v372 = vmul.f32 %v371, 1.442695
    %v373 = vpow.pop %v372
    %v374 = vadd.f32 %v373, 1.0
    %v375 = vrcp.pop %v374
    %v376 = vmul.f32 1.0, %v375
    %v377 = vtanh.pop %v370
    %379 = vrot.lane.b32.xlu0 %v288, 32
    %v380 = vpop.permute.xlu0 %379
    %v382 = vmul.f32 %v376, %v380
    %384 = vrot.lane.b32.xlu0 %v377, 64
    %v385 = vpop.permute.xlu0 %384
    %v387 = vmul.f32 %v376, %v385
    %389 = vrot.lane.b32.xlu0 %v387, 32
    %v390 = vpop.permute.xlu0 %389
    %v392 = vadd.f32 %v382, %v390
    %v393 = vtanh.pop %v392
    %395 = vrot.lane.b32.xlu0 %v393, 64
    %v396 = vpop.permute.xlu0 %395
    %v398 = vmul.f32 %v376, %v396
    %400 = vrot.lane.b32.xlu0 %v398, 32
    %v401 = vpop.permute.xlu0 %400
    %v402 = vsel %vm147, %v401, 0
    %404 = vmatprep.subr.mxu0 0.0
    %405 = vmatpush1.msra.mxu0 %v119
    %406 = vmatprep.subr.mxu0 0.0
    %407 = vmatpush1.msra.mxu0 %v120
    %408 = vmatprep.subr.mxu0 0.0
    %409 = vmatpush1.msra.mxu0 %v121
    %410 = vmatprep.subr.mxu0 0.0
    %411 = vmatpush1.msra.mxu0 %v122
    %412 = vmatprep.subr.mxu0 0.0
    %413 = vmatpush1.msra.mxu0 0.0
    %414 = vmatprep.subr.mxu0 0.0
    %415 = vmatpush1.msra.mxu0 0.0
    %416 = vmatprep.subr.mxu0 0.0
    %417 = vmatpush1.msra.mxu0 0.0
    %418 = vmatprep.subr.mxu0 0.0
    %419 = vmatpush1.msra.mxu0 0.0
    %420 = vmatprep.subr.mxu0 0.0
    %421 = vmatpush1.msra.mxu0 0.0
    %422 = vmatprep.subr.mxu0 0.0
    %423 = vmatpush1.msra.mxu0 0.0
    %424 = vmatprep.subr.mxu0 0.0
    %425 = vmatpush1.msra.mxu0 0.0
    %426 = vmatprep.subr.mxu0 0.0
    %427 = vmatpush1.msra.mxu0 0.0
    %428 = vmatprep.subr.mxu0 0.0
    %429 = vmatpush1.msra.mxu0 0.0
    %430 = vmatprep.subr.mxu0 0.0
    %431 = vmatpush1.msra.mxu0 0.0
    %432 = vmatprep.subr.mxu0 0.0
    %433 = vmatpush1.msra.mxu0 0.0
    %434 = vmatprep.subr.mxu0 0.0
    %435 = vmatpush1.msra.mxu0 0.0
    %436 = vmatprep.subr.mxu0 0.0
    %437 = vmatpush1.msra.mxu0 0.0
    %438 = vmatprep.subr.mxu0 0.0
    %439 = vmatpush1.msra.mxu0 0.0
    %440 = vmatprep.subr.mxu0 0.0
    %441 = vmatpush1.msra.mxu0 0.0
    %442 = vmatprep.subr.mxu0 0.0
    %443 = vmatpush1.msra.mxu0 0.0
    %444 = vmatprep.subr.mxu0 0.0
    %445 = vmatpush1.msra.mxu0 0.0
    %446 = vmatprep.subr.mxu0 0.0
    %447 = vmatpush1.msra.mxu0 0.0
    %448 = vmatprep.subr.mxu0 0.0
    %449 = vmatpush1.msra.mxu0 0.0
    %450 = vmatprep.subr.mxu0 0.0
    %451 = vmatpush1.msra.mxu0 0.0
    %452 = vmatprep.subr.mxu0 0.0
    %453 = vmatpush1.msra.mxu0 0.0
    %454 = vmatprep.subr.mxu0 0.0
    %455 = vmatpush1.msra.mxu0 0.0
    %456 = vmatprep.subr.mxu0 0.0
    %457 = vmatpush1.msra.mxu0 0.0
    %458 = vmatprep.subr.mxu0 0.0
    %459 = vmatpush1.msra.mxu0 0.0
    %460 = vmatprep.subr.mxu0 0.0
    %461 = vmatpush1.msra.mxu0 0.0
    %462 = vmatprep.subr.mxu0 0.0
    %463 = vmatpush1.msra.mxu0 0.0
    %464 = vmatprep.subr.mxu0 0.0
    %465 = vmatpush1.msra.mxu0 0.0
    %466 = vmatprep.subr.mxu0 0.0
    %467 = vmatpush1.msra.mxu0 0.0
    %468 = vmatprep.mubr.f32.mxu0 0.0
    %469 = vmatmul.mubr.f32.gmra.mrb[0].mxu0 %v402
    %v470 = vpop.f32.mrb[0].mxu0
    %v471 = vadd.f32 0.0, %v470
    %v472 = vpop.f32.mrb[0].mxu0
    %473 = vdwg.mxu0
    %v474 = vadd.f32 %v249, %v471
    %v475 = vxor.u32 %v474, 2147483648
    %v476 = vmul.f32 %v475, 1.442695
    %v477 = vpow.pop %v476
    %v478 = vadd.f32 %v477, 1.0
    %v479 = vrcp.pop %v478
    %v480 = vmul.f32 1.0, %v479
    %v481 = vtanh.pop %v474
    %v482 = vmul.f32 %v480, %v392
    %484 = vrot.lane.b32.xlu0 %v481, 64
    %v485 = vpop.permute.xlu0 %484
    %v487 = vmul.f32 %v480, %v485
    %489 = vrot.lane.b32.xlu0 %v487, 32
    %v490 = vpop.permute.xlu0 %489
    %v492 = vadd.f32 %v482, %v490
    %v493 = vtanh.pop %v492
    %495 = vrot.lane.b32.xlu0 %v493, 64
    %v496 = vpop.permute.xlu0 %495
    %v498 = vmul.f32 %v480, %v496
    %500 = vrot.lane.b32.xlu0 %v498, 32
    %v501 = vpop.permute.xlu0 %500
    %v502 = vsel %vm147, %v501, 0
    %504 = vmatprep.subr.mxu0 0.0
    %505 = vmatpush1.msra.mxu0 %v119
    %506 = vmatprep.subr.mxu0 0.0
    %507 = vmatpush1.msra.mxu0 %v120
    %508 = vmatprep.subr.mxu0 0.0
    %509 = vmatpush1.msra.mxu0 %v121
    %510 = vmatprep.subr.mxu0 0.0
    %511 = vmatpush1.msra.mxu0 %v122
    %512 = vmatprep.subr.mxu0 0.0
    %513 = vmatpush1.msra.mxu0 0.0
    %514 = vmatprep.subr.mxu0 0.0
    %515 = vmatpush1.msra.mxu0 0.0
    %516 = vmatprep.subr.mxu0 0.0
    %517 = vmatpush1.msra.mxu0 0.0
    %518 = vmatprep.subr.mxu0 0.0
    %519 = vmatpush1.msra.mxu0 0.0
    %520 = vmatprep.subr.mxu0 0.0
    %521 = vmatpush1.msra.mxu0 0.0
    %522 = vmatprep.subr.mxu0 0.0
    %523 = vmatpush1.msra.mxu0 0.0
    %524 = vmatprep.subr.mxu0 0.0
    %525 = vmatpush1.msra.mxu0 0.0
    %526 = vmatprep.subr.mxu0 0.0
    %527 = vmatpush1.msra.mxu0 0.0
    %528 = vmatprep.subr.mxu0 0.0
    %529 = vmatpush1.msra.mxu0 0.0
    %530 = vmatprep.subr.mxu0 0.0
    %531 = vmatpush1.msra.mxu0 0.0
    %532 = vmatprep.subr.mxu0 0.0
    %533 = vmatpush1.msra.mxu0 0.0
    %534 = vmatprep.subr.mxu0 0.0
    %535 = vmatpush1.msra.mxu0 0.0
    %536 = vmatprep.subr.mxu0 0.0
    %537 = vmatpush1.msra.mxu0 0.0
    %538 = vmatprep.subr.mxu0 0.0
    %539 = vmatpush1.msra.mxu0 0.0
    %540 = vmatprep.subr.mxu0 0.0
    %541 = vmatpush1.msra.mxu0 0.0
    %542 = vmatprep.subr.mxu0 0.0
    %543 = vmatpush1.msra.mxu0 0.0
    %544 = vmatprep.subr.mxu0 0.0
    %545 = vmatpush1.msra.mxu0 0.0
    %546 = vmatprep.subr.mxu0 0.0
    %547 = vmatpush1.msra.mxu0 0.0
    %548 = vmatprep.subr.mxu0 0.0
    %549 = vmatpush1.msra.mxu0 0.0
    %550 = vmatprep.subr.mxu0 0.0
    %551 = vmatpush1.msra.mxu0 0.0
    %552 = vmatprep.subr.mxu0 0.0
    %553 = vmatpush1.msra.mxu0 0.0
    %554 = vmatprep.subr.mxu0 0.0
    %555 = vmatpush1.msra.mxu0 0.0
    %556 = vmatprep.subr.mxu0 0.0
    %557 = vmatpush1.msra.mxu0 0.0
    %558 = vmatprep.subr.mxu0 0.0
    %559 = vmatpush1.msra.mxu0 0.0
    %560 = vmatprep.subr.mxu0 0.0
    %561 = vmatpush1.msra.mxu0 0.0
    %562 = vmatprep.subr.mxu0 0.0
    %563 = vmatpush1.msra.mxu0 0.0
    %564 = vmatprep.subr.mxu0 0.0
    %565 = vmatpush1.msra.mxu0 0.0
    %566 = vmatprep.subr.mxu0 0.0
    %567 = vmatpush1.msra.mxu0 0.0
    %568 = vmatprep.mubr.f32.mxu0 0.0
    %569 = vmatmul.mubr.f32.gmra.mrb[0].mxu0 %v502
    %v570 = vpop.f32.mrb[0].mxu0
    %v571 = vadd.f32 0.0, %v570
    %v572 = vpop.f32.mrb[0].mxu0
    %573 = vdwg.mxu0
    %v574 = vadd.f32 %v254, %v571
    %v575 = vxor.u32 %v574, 2147483648
    %v576 = vmul.f32 %v575, 1.442695
    %v577 = vpow.pop %v576
    %v578 = vadd.f32 %v577, 1.0
    %v579 = vrcp.pop %v578
    %v580 = vmul.f32 1.0, %v579
    %v581 = vtanh.pop %v574
    %v582 = vmul.f32 %v580, %v492
    %584 = vrot.lane.b32.xlu0 %v581, 64
    %v585 = vpop.permute.xlu0 %584
    %v587 = vmul.f32 %v580, %v585
    %589 = vrot.lane.b32.xlu0 %v587, 32
    %v590 = vpop.permute.xlu0 %589
    %v592 = vadd.f32 %v582, %v590
    %v593 = vtanh.pop %v592
    %595 = vrot.lane.b32.xlu0 %v593, 64
    %v596 = vpop.permute.xlu0 %595
    %v598 = vmul.f32 %v580, %v596
    %600 = vrot.lane.b32.xlu0 %v598, 32
    %v601 = vpop.permute.xlu0 %600
    %v602 = vsel %vm147, %v601, 0
    %604 = vmatprep.subr.mxu0 0.0
    %605 = vmatpush1.msra.mxu0 %v119
    %606 = vmatprep.subr.mxu0 0.0
    %607 = vmatpush1.msra.mxu0 %v120
    %608 = vmatprep.subr.mxu0 0.0
    %609 = vmatpush1.msra.mxu0 %v121
    %610 = vmatprep.subr.mxu0 0.0
    %611 = vmatpush1.msra.mxu0 %v122
    %612 = vmatprep.subr.mxu0 0.0
    %613 = vmatpush1.msra.mxu0 0.0
    %614 = vmatprep.subr.mxu0 0.0
    %615 = vmatpush1.msra.mxu0 0.0
    %616 = vmatprep.subr.mxu0 0.0
    %617 = vmatpush1.msra.mxu0 0.0
    %618 = vmatprep.subr.mxu0 0.0
    %619 = vmatpush1.msra.mxu0 0.0
    %620 = vmatprep.subr.mxu0 0.0
    %621 = vmatpush1.msra.mxu0 0.0
    %622 = vmatprep.subr.mxu0 0.0
    %623 = vmatpush1.msra.mxu0 0.0
    %624 = vmatprep.subr.mxu0 0.0
    %625 = vmatpush1.msra.mxu0 0.0
    %626 = vmatprep.subr.mxu0 0.0
    %627 = vmatpush1.msra.mxu0 0.0
    %628 = vmatprep.subr.mxu0 0.0
    %629 = vmatpush1.msra.mxu0 0.0
    %630 = vmatprep.subr.mxu0 0.0
    %631 = vmatpush1.msra.mxu0 0.0
    %632 = vmatprep.subr.mxu0 0.0
    %633 = vmatpush1.msra.mxu0 0.0
    %634 = vmatprep.subr.mxu0 0.0
    %635 = vmatpush1.msra.mxu0 0.0
    %636 = vmatprep.subr.mxu0 0.0
    %637 = vmatpush1.msra.mxu0 0.0
    %638 = vmatprep.subr.mxu0 0.0
    %639 = vmatpush1.msra.mxu0 0.0
    %640 = vmatprep.subr.mxu0 0.0
    %641 = vmatpush1.msra.mxu0 0.0
    %642 = vmatprep.subr.mxu0 0.0
    %643 = vmatpush1.msra.mxu0 0.0
    %644 = vmatprep.subr.mxu0 0.0
    %645 = vmatpush1.msra.mxu0 0.0
    %646 = vmatprep.subr.mxu0 0.0
    %647 = vmatpush1.msra.mxu0 0.0
    %648 = vmatprep.subr.mxu0 0.0
    %649 = vmatpush1.msra.mxu0 0.0
    %650 = vmatprep.subr.mxu0 0.0
    %651 = vmatpush1.msra.mxu0 0.0
    %652 = vmatprep.subr.mxu0 0.0
    %653 = vmatpush1.msra.mxu0 0.0
    %654 = vmatprep.subr.mxu0 0.0
    %655 = vmatpush1.msra.mxu0 0.0
    %656 = vmatprep.subr.mxu0 0.0
    %657 = vmatpush1.msra.mxu0 0.0
    %658 = vmatprep.subr.mxu0 0.0
    %659 = vmatpush1.msra.mxu0 0.0
    %660 = vmatprep.subr.mxu0 0.0
    %661 = vmatpush1.msra.mxu0 0.0
    %662 = vmatprep.subr.mxu0 0.0
    %663 = vmatpush1.msra.mxu0 0.0
    %664 = vmatprep.subr.mxu0 0.0
    %665 = vmatpush1.msra.mxu0 0.0
    %666 = vmatprep.subr.mxu0 0.0
    %667 = vmatpush1.msra.mxu0 0.0
    %668 = vmatprep.mubr.f32.mxu0 0.0
    %669 = vmatmul.mubr.f32.gmra.mrb[0].mxu0 %v602
    %v670 = vpop.f32.mrb[0].mxu0
    %v671 = vadd.f32 0.0, %v670
    %v672 = vpop.f32.mrb[0].mxu0
    %673 = vdwg.mxu0
    %v674 = vadd.f32 %v259, %v671
    %v675 = vxor.u32 %v674, 2147483648
    %v676 = vmul.f32 %v675, 1.442695
    %v677 = vpow.pop %v676
    %v678 = vadd.f32 %v677, 1.0
    %v679 = vrcp.pop %v678
    %v680 = vmul.f32 1.0, %v679
    %v681 = vtanh.pop %v674
    %v682 = vmul.f32 %v680, %v592
    %684 = vrot.lane.b32.xlu0 %v681, 64
    %v685 = vpop.permute.xlu0 %684
    %v687 = vmul.f32 %v680, %v685
    %689 = vrot.lane.b32.xlu0 %v687, 32
    %v690 = vpop.permute.xlu0 %689
    %v692 = vadd.f32 %v682, %v690
    %v693 = vtanh.pop %v692
    %695 = vrot.lane.b32.xlu0 %v693, 64
    %v696 = vpop.permute.xlu0 %695
    %v698 = vmul.f32 %v680, %v696
    %700 = vrot.lane.b32.xlu0 %v698, 32
    %v701 = vpop.permute.xlu0 %700
    %v702 = vsel %vm147, %v701, 0
    %704 = vmatprep.subr.mxu0 0.0
    %705 = vmatpush1.msra.mxu0 %v119
    %706 = vmatprep.subr.mxu0 0.0
    %707 = vmatpush1.msra.mxu0 %v120
    %708 = vmatprep.subr.mxu0 0.0
    %709 = vmatpush1.msra.mxu0 %v121
    %710 = vmatprep.subr.mxu0 0.0
    %711 = vmatpush1.msra.mxu0 %v122
    %712 = vmatprep.subr.mxu0 0.0
    %713 = vmatpush1.msra.mxu0 0.0
    %714 = vmatprep.subr.mxu0 0.0
    %715 = vmatpush1.msra.mxu0 0.0
    %716 = vmatprep.subr.mxu0 0.0
    %717 = vmatpush1.msra.mxu0 0.0
    %718 = vmatprep.subr.mxu0 0.0
    %719 = vmatpush1.msra.mxu0 0.0
    %720 = vmatprep.subr.mxu0 0.0
    %721 = vmatpush1.msra.mxu0 0.0
    %722 = vmatprep.subr.mxu0 0.0
    %723 = vmatpush1.msra.mxu0 0.0
    %724 = vmatprep.subr.mxu0 0.0
    %725 = vmatpush1.msra.mxu0 0.0
    %726 = vmatprep.subr.mxu0 0.0
    %727 = vmatpush1.msra.mxu0 0.0
    %728 = vmatprep.subr.mxu0 0.0
    %729 = vmatpush1.msra.mxu0 0.0
    %730 = vmatprep.subr.mxu0 0.0
    %731 = vmatpush1.msra.mxu0 0.0
    %732 = vmatprep.subr.mxu0 0.0
    %733 = vmatpush1.msra.mxu0 0.0
    %734 = vmatprep.subr.mxu0 0.0
    %735 = vmatpush1.msra.mxu0 0.0
    %736 = vmatprep.subr.mxu0 0.0
    %737 = vmatpush1.msra.mxu0 0.0
    %738 = vmatprep.subr.mxu0 0.0
    %739 = vmatpush1.msra.mxu0 0.0
    %740 = vmatprep.subr.mxu0 0.0
    %741 = vmatpush1.msra.mxu0 0.0
    %742 = vmatprep.subr.mxu0 0.0
    %743 = vmatpush1.msra.mxu0 0.0
    %744 = vmatprep.subr.mxu0 0.0
    %745 = vmatpush1.msra.mxu0 0.0
    %746 = vmatprep.subr.mxu0 0.0
    %747 = vmatpush1.msra.mxu0 0.0
    %748 = vmatprep.subr.mxu0 0.0
    %749 = vmatpush1.msra.mxu0 0.0
    %750 = vmatprep.subr.mxu0 0.0
    %751 = vmatpush1.msra.mxu0 0.0
    %752 = vmatprep.subr.mxu0 0.0
    %753 = vmatpush1.msra.mxu0 0.0
    %754 = vmatprep.subr.mxu0 0.0
    %755 = vmatpush1.msra.mxu0 0.0
    %756 = vmatprep.subr.mxu0 0.0
    %757 = vmatpush1.msra.mxu0 0.0
    %758 = vmatprep.subr.mxu0 0.0
    %759 = vmatpush1.msra.mxu0 0.0
    %760 = vmatprep.subr.mxu0 0.0
    %761 = vmatpush1.msra.mxu0 0.0
    %762 = vmatprep.subr.mxu0 0.0
    %763 = vmatpush1.msra.mxu0 0.0
    %764 = vmatprep.subr.mxu0 0.0
    %765 = vmatpush1.msra.mxu0 0.0
    %766 = vmatprep.subr.mxu0 0.0
    %767 = vmatpush1.msra.mxu0 0.0
    %768 = vmatprep.mubr.f32.mxu0 0.0
    %769 = vmatmul.mubr.f32.gmra.mrb[0].mxu0 %v702
    %v770 = vpop.f32.mrb[0].mxu0
    %v771 = vadd.f32 0.0, %v770
    %v772 = vpop.f32.mrb[0].mxu0
    %773 = vdwg.mxu0
    %v774 = vadd.f32 %v264, %v771
    %v775 = vxor.u32 %v774, 2147483648
    %v776 = vmul.f32 %v775, 1.442695
    %v777 = vpow.pop %v776
    %v778 = vadd.f32 %v777, 1.0
    %v779 = vrcp.pop %v778
    %v780 = vmul.f32 1.0, %v779
    %v781 = vtanh.pop %v774
    %v782 = vmul.f32 %v780, %v692
    %784 = vrot.lane.b32.xlu0 %v781, 64
    %v785 = vpop.permute.xlu0 %784
    %v787 = vmul.f32 %v780, %v785
    %789 = vrot.lane.b32.xlu0 %v787, 32
    %v790 = vpop.permute.xlu0 %789
    %v792 = vadd.f32 %v782, %v790
    %v793 = vtanh.pop %v792
    %795 = vrot.lane.b32.xlu0 %v793, 64
    %v796 = vpop.permute.xlu0 %795
    %v798 = vmul.f32 %v780, %v796
    %800 = vrot.lane.b32.xlu0 %v798, 32
    %v801 = vpop.permute.xlu0 %800
    %v802 = vsel %vm147, %v801, 0
    %804 = vmatprep.subr.mxu0 0.0
    %805 = vmatpush1.msra.mxu0 %v119
    %806 = vmatprep.subr.mxu0 0.0
    %807 = vmatpush1.msra.mxu0 %v120
    %808 = vmatprep.subr.mxu0 0.0
    %809 = vmatpush1.msra.mxu0 %v121
    %810 = vmatprep.subr.mxu0 0.0
    %811 = vmatpush1.msra.mxu0 %v122
    %812 = vmatprep.subr.mxu0 0.0
    %813 = vmatpush1.msra.mxu0 0.0
    %814 = vmatprep.subr.mxu0 0.0
    %815 = vmatpush1.msra.mxu0 0.0
    %816 = vmatprep.subr.mxu0 0.0
    %817 = vmatpush1.msra.mxu0 0.0
    %818 = vmatprep.subr.mxu0 0.0
    %819 = vmatpush1.msra.mxu0 0.0
    %820 = vmatprep.subr.mxu0 0.0
    %821 = vmatpush1.msra.mxu0 0.0
    %822 = vmatprep.subr.mxu0 0.0
    %823 = vmatpush1.msra.mxu0 0.0
    %824 = vmatprep.subr.mxu0 0.0
    %825 = vmatpush1.msra.mxu0 0.0
    %826 = vmatprep.subr.mxu0 0.0
    %827 = vmatpush1.msra.mxu0 0.0
    %828 = vmatprep.subr.mxu0 0.0
    %829 = vmatpush1.msra.mxu0 0.0
    %830 = vmatprep.subr.mxu0 0.0
    %831 = vmatpush1.msra.mxu0 0.0
    %832 = vmatprep.subr.mxu0 0.0
    %833 = vmatpush1.msra.mxu0 0.0
    %834 = vmatprep.subr.mxu0 0.0
    %835 = vmatpush1.msra.mxu0 0.0
    %836 = vmatprep.subr.mxu0 0.0
    %837 = vmatpush1.msra.mxu0 0.0
    %838 = vmatprep.subr.mxu0 0.0
    %839 = vmatpush1.msra.mxu0 0.0
    %840 = vmatprep.subr.mxu0 0.0
    %841 = vmatpush1.msra.mxu0 0.0
    %842 = vmatprep.subr.mxu0 0.0
    %843 = vmatpush1.msra.mxu0 0.0
    %844 = vmatprep.subr.mxu0 0.0
    %845 = vmatpush1.msra.mxu0 0.0
    %846 = vmatprep.subr.mxu0 0.0
    %847 = vmatpush1.msra.mxu0 0.0
    %848 = vmatprep.subr.mxu0 0.0
    %849 = vmatpush1.msra.mxu0 0.0
    %850 = vmatprep.subr.mxu0 0.0
    %851 = vmatpush1.msra.mxu0 0.0
    %852 = vmatprep.subr.mxu0 0.0
    %853 = vmatpush1.msra.mxu0 0.0
    %854 = vmatprep.subr.mxu0 0.0
    %855 = vmatpush1.msra.mxu0 0.0
    %856 = vmatprep.subr.mxu0 0.0
    %857 = vmatpush1.msra.mxu0 0.0
    %858 = vmatprep.subr.mxu0 0.0
    %859 = vmatpush1.msra.mxu0 0.0
    %860 = vmatprep.subr.mxu0 0.0
    %861 = vmatpush1.msra.mxu0 0.0
    %862 = vmatprep.subr.mxu0 0.0
    %863 = vmatpush1.msra.mxu0 0.0
    %864 = vmatprep.subr.mxu0 0.0
    %865 = vmatpush1.msra.mxu0 0.0
    %866 = vmatprep.subr.mxu0 0.0
    %867 = vmatpush1.msra.mxu0 0.0
    %868 = vmatprep.mubr.f32.mxu0 0.0
    %869 = vmatmul.mubr.f32.gmra.mrb[0].mxu0 %v802
    %v870 = vpop.f32.mrb[0].mxu0
    %v871 = vadd.f32 0.0, %v870
    %v872 = vpop.f32.mrb[0].mxu0
    %873 = vdwg.mxu0
    %v874 = vadd.f32 %v269, %v871
    %v875 = vxor.u32 %v874, 2147483648
    %v876 = vmul.f32 %v875, 1.442695
    %v877 = vpow.pop %v876
    %v878 = vadd.f32 %v877, 1.0
    %v879 = vrcp.pop %v878
    %v880 = vmul.f32 1.0, %v879
    %v881 = vtanh.pop %v874
    %v882 = vmul.f32 %v880, %v792
    %884 = vrot.lane.b32.xlu0 %v881, 64
    %v885 = vpop.permute.xlu0 %884
    %v887 = vmul.f32 %v880, %v885
    %889 = vrot.lane.b32.xlu0 %v887, 32
    %v890 = vpop.permute.xlu0 %889
    %v892 = vadd.f32 %v882, %v890
    %v893 = vtanh.pop %v892
    %895 = vrot.lane.b32.xlu0 %v893, 64
    %v896 = vpop.permute.xlu0 %895
    %v898 = vmul.f32 %v880, %v896
    %900 = vrot.lane.b32.xlu0 %v898, 32
    %v901 = vpop.permute.xlu0 %900
    %v902 = vsel %vm147, %v901, 0
    %904 = vmatprep.subr.mxu0 0.0
    %905 = vmatpush1.msra.mxu0 %v119
    %906 = vmatprep.subr.mxu0 0.0
    %907 = vmatpush1.msra.mxu0 %v120
    %908 = vmatprep.subr.mxu0 0.0
    %909 = vmatpush1.msra.mxu0 %v121
    %910 = vmatprep.subr.mxu0 0.0
    %911 = vmatpush1.msra.mxu0 %v122
    %912 = vmatprep.subr.mxu0 0.0
    %913 = vmatpush1.msra.mxu0 0.0
    %914 = vmatprep.subr.mxu0 0.0
    %915 = vmatpush1.msra.mxu0 0.0
    %916 = vmatprep.subr.mxu0 0.0
    %917 = vmatpush1.msra.mxu0 0.0
    %918 = vmatprep.subr.mxu0 0.0
    %919 = vmatpush1.msra.mxu0 0.0
    %920 = vmatprep.subr.mxu0 0.0
    %921 = vmatpush1.msra.mxu0 0.0
    %922 = vmatprep.subr.mxu0 0.0
    %923 = vmatpush1.msra.mxu0 0.0
    %924 = vmatprep.subr.mxu0 0.0
    %925 = vmatpush1.msra.mxu0 0.0
    %926 = vmatprep.subr.mxu0 0.0
    %927 = vmatpush1.msra.mxu0 0.0
    %928 = vmatprep.subr.mxu0 0.0
    %929 = vmatpush1.msra.mxu0 0.0
    %930 = vmatprep.subr.mxu0 0.0
    %931 = vmatpush1.msra.mxu0 0.0
    %932 = vmatprep.subr.mxu0 0.0
    %933 = vmatpush1.msra.mxu0 0.0
    %934 = vmatprep.subr.mxu0 0.0
    %935 = vmatpush1.msra.mxu0 0.0
    %936 = vmatprep.subr.mxu0 0.0
    %937 = vmatpush1.msra.mxu0 0.0
    %938 = vmatprep.subr.mxu0 0.0
    %939 = vmatpush1.msra.mxu0 0.0
    %940 = vmatprep.subr.mxu0 0.0
    %941 = vmatpush1.msra.mxu0 0.0
    %942 = vmatprep.subr.mxu0 0.0
    %943 = vmatpush1.msra.mxu0 0.0
    %944 = vmatprep.subr.mxu0 0.0
    %945 = vmatpush1.msra.mxu0 0.0
    %946 = vmatprep.subr.mxu0 0.0
    %947 = vmatpush1.msra.mxu0 0.0
    %948 = vmatprep.subr.mxu0 0.0
    %949 = vmatpush1.msra.mxu0 0.0
    %950 = vmatprep.subr.mxu0 0.0
    %951 = vmatpush1.msra.mxu0 0.0
    %952 = vmatprep.subr.mxu0 0.0
    %953 = vmatpush1.msra.mxu0 0.0
    %954 = vmatprep.subr.mxu0 0.0
    %955 = vmatpush1.msra.mxu0 0.0
    %956 = vmatprep.subr.mxu0 0.0
    %957 = vmatpush1.msra.mxu0 0.0
    %958 = vmatprep.subr.mxu0 0.0
    %959 = vmatpush1.msra.mxu0 0.0
    %960 = vmatprep.subr.mxu0 0.0
    %961 = vmatpush1.msra.mxu0 0.0
    %962 = vmatprep.subr.mxu0 0.0
    %963 = vmatpush1.msra.mxu0 0.0
    %964 = vmatprep.subr.mxu0 0.0
    %965 = vmatpush1.msra.mxu0 0.0
    %966 = vmatprep.subr.mxu0 0.0
    %967 = vmatpush1.msra.mxu0 0.0
    %968 = vmatprep.mubr.f32.mxu0 0.0
    %969 = vmatmul.mubr.f32.gmra.mrb[0].mxu0 %v902
    %v970 = vpop.f32.mrb[0].mxu0
    %v971 = vadd.f32 0.0, %v970
    %v972 = vpop.f32.mrb[0].mxu0
    %973 = vdwg.mxu0
    %v974 = vadd.f32 %v274, %v971
    %v975 = vxor.u32 %v974, 2147483648
    %v976 = vmul.f32 %v975, 1.442695
    %v977 = vpow.pop %v976
    %v978 = vadd.f32 %v977, 1.0
    %v979 = vrcp.pop %v978
    %v980 = vmul.f32 1.0, %v979
    %v981 = vtanh.pop %v974
    %v982 = vmul.f32 %v980, %v892
    %984 = vrot.lane.b32.xlu0 %v981, 64
    %v985 = vpop.permute.xlu0 %984
    %v987 = vmul.f32 %v980, %v985
    %989 = vrot.lane.b32.xlu0 %v987, 32
    %v990 = vpop.permute.xlu0 %989
    %v992 = vadd.f32 %v982, %v990
    %v993 = vtanh.pop %v992
    %995 = vrot.lane.b32.xlu0 %v993, 64
    %v996 = vpop.permute.xlu0 %995
    %v998 = vmul.f32 %v980, %v996
    %v1000 = vlaneseq
    %v1001 = vshrl.u32 %v1000, 7
    %v1002 = vsub.s32 0, %v1001
    %v1003 = vrot.slane %v132, %v1002
    %1006 = vrot.lane.b32.xlu0 %v998, 32
    %v1007 = vpop.permute.xlu0 %1006
    %v1008 = vsel %vm147, %v1007, 0
    %1010 = vmatprep.subr.mxu0 0.0
    %1011 = vmatpush1.msra.mxu0 %v124
    %1012 = vmatprep.subr.mxu0 0.0
    %1013 = vmatpush1.msra.mxu0 %v125
    %1014 = vmatprep.subr.mxu0 0.0
    %1015 = vmatpush1.msra.mxu0 %v126
    %1016 = vmatprep.subr.mxu0 0.0
    %1017 = vmatpush1.msra.mxu0 %v127
    %1018 = vmatprep.subr.mxu0 0.0
    %1019 = vmatpush1.msra.mxu0 0.0
    %1020 = vmatprep.subr.mxu0 0.0
    %1021 = vmatpush1.msra.mxu0 0.0
    %1022 = vmatprep.subr.mxu0 0.0
    %1023 = vmatpush1.msra.mxu0 0.0
    %1024 = vmatprep.subr.mxu0 0.0
    %1025 = vmatpush1.msra.mxu0 0.0
    %1026 = vmatprep.subr.mxu0 0.0
    %1027 = vmatpush1.msra.mxu0 0.0
    %1028 = vmatprep.subr.mxu0 0.0
    %1029 = vmatpush1.msra.mxu0 0.0
    %1030 = vmatprep.subr.mxu0 0.0
    %1031 = vmatpush1.msra.mxu0 0.0
    %1032 = vmatprep.subr.mxu0 0.0
    %1033 = vmatpush1.msra.mxu0 0.0
    %1034 = vmatprep.subr.mxu0 0.0
    %1035 = vmatpush1.msra.mxu0 0.0
    %1036 = vmatprep.subr.mxu0 0.0
    %1037 = vmatpush1.msra.mxu0 0.0
    %1038 = vmatprep.subr.mxu0 0.0
    %1039 = vmatpush1.msra.mxu0 0.0
    %1040 = vmatprep.subr.mxu0 0.0
    %1041 = vmatpush1.msra.mxu0 0.0
    %1042 = vmatprep.subr.mxu0 0.0
    %1043 = vmatpush1.msra.mxu0 0.0
    %1044 = vmatprep.subr.mxu0 0.0
    %1045 = vmatpush1.msra.mxu0 0.0
    %1046 = vmatprep.subr.mxu0 0.0
    %1047 = vmatpush1.msra.mxu0 0.0
    %1048 = vmatprep.subr.mxu0 0.0
    %1049 = vmatpush1.msra.mxu0 0.0
    %1050 = vmatprep.subr.mxu0 0.0
    %1051 = vmatpush1.msra.mxu0 0.0
    %1052 = vmatprep.subr.mxu0 0.0
    %1053 = vmatpush1.msra.mxu0 0.0
    %1054 = vmatprep.subr.mxu0 0.0
    %1055 = vmatpush1.msra.mxu0 0.0
    %1056 = vmatprep.subr.mxu0 0.0
    %1057 = vmatpush1.msra.mxu0 0.0
    %1058 = vmatprep.subr.mxu0 0.0
    %1059 = vmatpush1.msra.mxu0 0.0
    %1060 = vmatprep.subr.mxu0 0.0
    %1061 = vmatpush1.msra.mxu0 0.0
    %1062 = vmatprep.subr.mxu0 0.0
    %1063 = vmatpush1.msra.mxu0 0.0
    %1064 = vmatprep.subr.mxu0 0.0
    %1065 = vmatpush1.msra.mxu0 0.0
    %1066 = vmatprep.subr.mxu0 0.0
    %1067 = vmatpush1.msra.mxu0 0.0
    %1068 = vmatprep.subr.mxu0 0.0
    %1069 = vmatpush1.msra.mxu0 0.0
    %1070 = vmatprep.subr.mxu0 0.0
    %1071 = vmatpush1.msra.mxu0 0.0
    %1072 = vmatprep.subr.mxu0 0.0
    %1073 = vmatpush1.msra.mxu0 0.0
    %1074 = vmatprep.mubr.f32.mxu0 0.0
    %1075 = vmatmul.mubr.f32.gmra.mrb[0].mxu0 %v1008
    %v1076 = vpop.f32.mrb[0].mxu0
    %v1077 = vadd.f32 %v1003, %v1076
    %v1078 = vpop.f32.mrb[0].mxu0
    %1079 = vdwg.mxu0
    %v1080 = vxor.u32 %v1077, 2147483648
    %v1081 = vmul.f32 %v1080, 1.442695
    %v1082 = vpow.pop %v1081
    %v1083 = vadd.f32 %v1082, 1.0
    %v1084 = vrcp.pop %v1083
    %v1085 = vmul.f32 1.0, %v1084
    %v1086 = vtanh.pop %v1077
    %1088 = vrot.lane.b32.xlu0 %v1086, 64
    %v1089 = vpop.permute.xlu0 %1088
    %v1091 = vmul.f32 %v1085, %v1089
    %v1092 = vtanh.pop %v1091
    %1094 = vrot.lane.b32.xlu0 %v1092, 96
    %v1095 = vpop.permute.xlu0 %1094
    %v1097 = vmul.f32 %v1085, %v1095
    %1099 = vrot.lane.b32.xlu0 %v1097, 32
    %v1100 = vpop.permute.xlu0 %1099
    %v1101 = vsel %vm147, %v1100, 0
    %1103 = vmatprep.subr.mxu0 0.0
    %1104 = vmatpush1.msra.mxu0 %v128
    %1105 = vmatprep.subr.mxu0 0.0
    %1106 = vmatpush1.msra.mxu0 %v129
    %1107 = vmatprep.subr.mxu0 0.0
    %1108 = vmatpush1.msra.mxu0 %v130
    %1109 = vmatprep.subr.mxu0 0.0
    %1110 = vmatpush1.msra.mxu0 %v131
    %1111 = vmatprep.subr.mxu0 0.0
    %1112 = vmatpush1.msra.mxu0 0.0
    %1113 = vmatprep.subr.mxu0 0.0
    %1114 = vmatpush1.msra.mxu0 0.0
    %1115 = vmatprep.subr.mxu0 0.0
    %1116 = vmatpush1.msra.mxu0 0.0
    %1117 = vmatprep.subr.mxu0 0.0
    %1118 = vmatpush1.msra.mxu0 0.0
    %1119 = vmatprep.subr.mxu0 0.0
    %1120 = vmatpush1.msra.mxu0 0.0
    %1121 = vmatprep.subr.mxu0 0.0
    %1122 = vmatpush1.msra.mxu0 0.0
    %1123 = vmatprep.subr.mxu0 0.0
    %1124 = vmatpush1.msra.mxu0 0.0
    %1125 = vmatprep.subr.mxu0 0.0
    %1126 = vmatpush1.msra.mxu0 0.0
    %1127 = vmatprep.subr.mxu0 0.0
    %1128 = vmatpush1.msra.mxu0 0.0
    %1129 = vmatprep.subr.mxu0 0.0
    %1130 = vmatpush1.msra.mxu0 0.0
    %1131 = vmatprep.subr.mxu0 0.0
    %1132 = vmatpush1.msra.mxu0 0.0
    %1133 = vmatprep.subr.mxu0 0.0
    %1134 = vmatpush1.msra.mxu0 0.0
    %1135 = vmatprep.subr.mxu0 0.0
    %1136 = vmatpush1.msra.mxu0 0.0
    %1137 = vmatprep.subr.mxu0 0.0
    %1138 = vmatpush1.msra.mxu0 0.0
    %1139 = vmatprep.subr.mxu0 0.0
    %1140 = vmatpush1.msra.mxu0 0.0
    %1141 = vmatprep.subr.mxu0 0.0
    %1142 = vmatpush1.msra.mxu0 0.0
    %1143 = vmatprep.subr.mxu0 0.0
    %1144 = vmatpush1.msra.mxu0 0.0
    %1145 = vmatprep.subr.mxu0 0.0
    %1146 = vmatpush1.msra.mxu0 0.0
    %1147 = vmatprep.subr.mxu0 0.0
    %1148 = vmatpush1.msra.mxu0 0.0
    %1149 = vmatprep.subr.mxu0 0.0
    %1150 = vmatpush1.msra.mxu0 0.0
    %1151 = vmatprep.subr.mxu0 0.0
    %1152 = vmatpush1.msra.mxu0 0.0
    %1153 = vmatprep.subr.mxu0 0.0
    %1154 = vmatpush1.msra.mxu0 0.0
    %1155 = vmatprep.subr.mxu0 0.0
    %1156 = vmatpush1.msra.mxu0 0.0
    %1157 = vmatprep.subr.mxu0 0.0
    %1158 = vmatpush1.msra.mxu0 0.0
    %1159 = vmatprep.subr.mxu0 0.0
    %1160 = vmatpush1.msra.mxu0 0.0
    %1161 = vmatprep.subr.mxu0 0.0
    %1162 = vmatpush1.msra.mxu0 0.0
    %1163 = vmatprep.subr.mxu0 0.0
    %1164 = vmatpush1.msra.mxu0 0.0
    %1165 = vmatprep.subr.mxu0 0.0
    %1166 = vmatpush1.msra.mxu0 0.0
    %1167 = vmatprep.mubr.f32.mxu0 0.0
    %1168 = vmatmul.mubr.f32.gmra.mrb[0].mxu0 %v1101
    %v1169 = vpop.f32.mrb[0].mxu0
    %v1170 = vadd.f32 0.0, %v1169
    %v1171 = vpop.f32.mrb[0].mxu0
    %1172 = vdwg.mxu0
    %v1173 = vadd.f32 %v1077, %v1170
    %v1174 = vxor.u32 %v1173, 2147483648
    %v1175 = vmul.f32 %v1174, 1.442695
    %v1176 = vpow.pop %v1175
    %v1177 = vadd.f32 %v1176, 1.0
    %v1178 = vrcp.pop %v1177
    %v1179 = vmul.f32 1.0, %v1178
    %v1180 = vtanh.pop %v1173
    %1182 = vrot.lane.b32.xlu0 %v1091, 32
    %v1183 = vpop.permute.xlu0 %1182
    %v1185 = vmul.f32 %v1179, %v1183
    %1187 = vrot.lane.b32.xlu0 %v1180, 64
    %v1188 = vpop.permute.xlu0 %1187
    %v1190 = vmul.f32 %v1179, %v1188
    %1192 = vrot.lane.b32.xlu0 %v1190, 32
    %v1193 = vpop.permute.xlu0 %1192
    %v1195 = vadd.f32 %v1185, %v1193
    %v1196 = vtanh.pop %v1195
    %1198 = vrot.lane.b32.xlu0 %v1196, 64
    %v1199 = vpop.permute.xlu0 %1198
    %v1201 = vmul.f32 %v1179, %v1199
    %1203 = vrot.lane.b32.xlu0 %v1201, 32
    %v1204 = vpop.permute.xlu0 %1203
    %v1205 = vsel %vm147, %v1204, 0
    %1207 = vmatprep.subr.mxu0 0.0
    %1208 = vmatpush1.msra.mxu0 %v128
    %1209 = vmatprep.subr.mxu0 0.0
    %1210 = vmatpush1.msra.mxu0 %v129
    %1211 = vmatprep.subr.mxu0 0.0
    %1212 = vmatpush1.msra.mxu0 %v130
    %1213 = vmatprep.subr.mxu0 0.0
    %1214 = vmatpush1.msra.mxu0 %v131
    %1215 = vmatprep.subr.mxu0 0.0
    %1216 = vmatpush1.msra.mxu0 0.0
    %1217 = vmatprep.subr.mxu0 0.0
    %1218 = vmatpush1.msra.mxu0 0.0
    %1219 = vmatprep.subr.mxu0 0.0
    %1220 = vmatpush1.msra.mxu0 0.0
    %1221 = vmatprep.subr.mxu0 0.0
    %1222 = vmatpush1.msra.mxu0 0.0
    %1223 = vmatprep.subr.mxu0 0.0
    %1224 = vmatpush1.msra.mxu0 0.0
    %1225 = vmatprep.subr.mxu0 0.0
    %1226 = vmatpush1.msra.mxu0 0.0
    %1227 = vmatprep.subr.mxu0 0.0
    %1228 = vmatpush1.msra.mxu0 0.0
    %1229 = vmatprep.subr.mxu0 0.0
    %1230 = vmatpush1.msra.mxu0 0.0
    %1231 = vmatprep.subr.mxu0 0.0
    %1232 = vmatpush1.msra.mxu0 0.0
    %1233 = vmatprep.subr.mxu0 0.0
    %1234 = vmatpush1.msra.mxu0 0.0
    %1235 = vmatprep.subr.mxu0 0.0
    %1236 = vmatpush1.msra.mxu0 0.0
    %1237 = vmatprep.subr.mxu0 0.0
    %1238 = vmatpush1.msra.mxu0 0.0
    %1239 = vmatprep.subr.mxu0 0.0
    %1240 = vmatpush1.msra.mxu0 0.0
    %1241 = vmatprep.subr.mxu0 0.0
    %1242 = vmatpush1.msra.mxu0 0.0
    %1243 = vmatprep.subr.mxu0 0.0
    %1244 = vmatpush1.msra.mxu0 0.0
    %1245 = vmatprep.subr.mxu0 0.0
    %1246 = vmatpush1.msra.mxu0 0.0
    %1247 = vmatprep.subr.mxu0 0.0
    %1248 = vmatpush1.msra.mxu0 0.0
    %1249 = vmatprep.subr.mxu0 0.0
    %1250 = vmatpush1.msra.mxu0 0.0
    %1251 = vmatprep.subr.mxu0 0.0
    %1252 = vmatpush1.msra.mxu0 0.0
    %1253 = vmatprep.subr.mxu0 0.0
    %1254 = vmatpush1.msra.mxu0 0.0
    %1255 = vmatprep.subr.mxu0 0.0
    %1256 = vmatpush1.msra.mxu0 0.0
    %1257 = vmatprep.subr.mxu0 0.0
    %1258 = vmatpush1.msra.mxu0 0.0
    %1259 = vmatprep.subr.mxu0 0.0
    %1260 = vmatpush1.msra.mxu0 0.0
    %1261 = vmatprep.subr.mxu0 0.0
    %1262 = vmatpush1.msra.mxu0 0.0
    %1263 = vmatprep.subr.mxu0 0.0
    %1264 = vmatpush1.msra.mxu0 0.0
    %1265 = vmatprep.subr.mxu0 0.0
    %1266 = vmatpush1.msra.mxu0 0.0
    %1267 = vmatprep.subr.mxu0 0.0
    %1268 = vmatpush1.msra.mxu0 0.0
    %1269 = vmatprep.subr.mxu0 0.0
    %1270 = vmatpush1.msra.mxu0 0.0
    %1271 = vmatprep.mubr.f32.mxu0 0.0
    %1272 = vmatmul.mubr.f32.gmra.mrb[0].mxu0 %v1205
    %v1273 = vpop.f32.mrb[0].mxu0
    %v1274 = vadd.f32 0.0, %v1273
    %v1275 = vpop.f32.mrb[0].mxu0
    %1276 = vdwg.mxu0
    %v1277 = vadd.f32 %v1077, %v1274
    %v1278 = vxor.u32 %v1277, 2147483648
    %v1279 = vmul.f32 %v1278, 1.442695
    %v1280 = vpow.pop %v1279
    %v1281 = vadd.f32 %v1280, 1.0
    %v1282 = vrcp.pop %v1281
    %v1283 = vmul.f32 1.0, %v1282
    %v1284 = vtanh.pop %v1277
    %v1285 = vmul.f32 %v1283, %v1195
    %1287 = vrot.lane.b32.xlu0 %v1284, 64
    %v1288 = vpop.permute.xlu0 %1287
    %v1290 = vmul.f32 %v1283, %v1288
    %1292 = vrot.lane.b32.xlu0 %v1290, 32
    %v1293 = vpop.permute.xlu0 %1292
    %v1295 = vadd.f32 %v1285, %v1293
    %v1296 = vtanh.pop %v1295
    %1298 = vrot.lane.b32.xlu0 %v1296, 64
    %v1299 = vpop.permute.xlu0 %1298
    %v1301 = vmul.f32 %v1283, %v1299
    %1303 = vrot.lane.b32.xlu0 %v1301, 32
    %v1304 = vpop.permute.xlu0 %1303
    %v1305 = vsel %vm147, %v1304, 0
    %1307 = vmatprep.subr.mxu0 0.0
    %1308 = vmatpush1.msra.mxu0 %v128
    %1309 = vmatprep.subr.mxu0 0.0
    %1310 = vmatpush1.msra.mxu0 %v129
    %1311 = vmatprep.subr.mxu0 0.0
    %1312 = vmatpush1.msra.mxu0 %v130
    %1313 = vmatprep.subr.mxu0 0.0
    %1314 = vmatpush1.msra.mxu0 %v131
    %1315 = vmatprep.subr.mxu0 0.0
    %1316 = vmatpush1.msra.mxu0 0.0
    %1317 = vmatprep.subr.mxu0 0.0
    %1318 = vmatpush1.msra.mxu0 0.0
    %1319 = vmatprep.subr.mxu0 0.0
    %1320 = vmatpush1.msra.mxu0 0.0
    %1321 = vmatprep.subr.mxu0 0.0
    %1322 = vmatpush1.msra.mxu0 0.0
    %1323 = vmatprep.subr.mxu0 0.0
    %1324 = vmatpush1.msra.mxu0 0.0
    %1325 = vmatprep.subr.mxu0 0.0
    %1326 = vmatpush1.msra.mxu0 0.0
    %1327 = vmatprep.subr.mxu0 0.0
    %1328 = vmatpush1.msra.mxu0 0.0
    %1329 = vmatprep.subr.mxu0 0.0
    %1330 = vmatpush1.msra.mxu0 0.0
    %1331 = vmatprep.subr.mxu0 0.0
    %1332 = vmatpush1.msra.mxu0 0.0
    %1333 = vmatprep.subr.mxu0 0.0
    %1334 = vmatpush1.msra.mxu0 0.0
    %1335 = vmatprep.subr.mxu0 0.0
    %1336 = vmatpush1.msra.mxu0 0.0
    %1337 = vmatprep.subr.mxu0 0.0
    %1338 = vmatpush1.msra.mxu0 0.0
    %1339 = vmatprep.subr.mxu0 0.0
    %1340 = vmatpush1.msra.mxu0 0.0
    %1341 = vmatprep.subr.mxu0 0.0
    %1342 = vmatpush1.msra.mxu0 0.0
    %1343 = vmatprep.subr.mxu0 0.0
    %1344 = vmatpush1.msra.mxu0 0.0
    %1345 = vmatprep.subr.mxu0 0.0
    %1346 = vmatpush1.msra.mxu0 0.0
    %1347 = vmatprep.subr.mxu0 0.0
    %1348 = vmatpush1.msra.mxu0 0.0
    %1349 = vmatprep.subr.mxu0 0.0
    %1350 = vmatpush1.msra.mxu0 0.0
    %1351 = vmatprep.subr.mxu0 0.0
    %1352 = vmatpush1.msra.mxu0 0.0
    %1353 = vmatprep.subr.mxu0 0.0
    %1354 = vmatpush1.msra.mxu0 0.0
    %1355 = vmatprep.subr.mxu0 0.0
    %1356 = vmatpush1.msra.mxu0 0.0
    %1357 = vmatprep.subr.mxu0 0.0
    %1358 = vmatpush1.msra.mxu0 0.0
    %1359 = vmatprep.subr.mxu0 0.0
    %1360 = vmatpush1.msra.mxu0 0.0
    %1361 = vmatprep.subr.mxu0 0.0
    %1362 = vmatpush1.msra.mxu0 0.0
    %1363 = vmatprep.subr.mxu0 0.0
    %1364 = vmatpush1.msra.mxu0 0.0
    %1365 = vmatprep.subr.mxu0 0.0
    %1366 = vmatpush1.msra.mxu0 0.0
    %1367 = vmatprep.subr.mxu0 0.0
    %1368 = vmatpush1.msra.mxu0 0.0
    %1369 = vmatprep.subr.mxu0 0.0
    %1370 = vmatpush1.msra.mxu0 0.0
    %1371 = vmatprep.mubr.f32.mxu0 0.0
    %1372 = vmatmul.mubr.f32.gmra.mrb[0].mxu0 %v1305
    %v1373 = vpop.f32.mrb[0].mxu0
    %v1374 = vadd.f32 0.0, %v1373
    %v1375 = vpop.f32.mrb[0].mxu0
    %1376 = vdwg.mxu0
    %v1377 = vadd.f32 %v1077, %v1374
    %v1378 = vxor.u32 %v1377, 2147483648
    %v1379 = vmul.f32 %v1378, 1.442695
    %v1380 = vpow.pop %v1379
    %v1381 = vadd.f32 %v1380, 1.0
    %v1382 = vrcp.pop %v1381
    %v1383 = vmul.f32 1.0, %v1382
    %v1384 = vtanh.pop %v1377
    %v1385 = vmul.f32 %v1383, %v1295
    %1387 = vrot.lane.b32.xlu0 %v1384, 64
    %v1388 = vpop.permute.xlu0 %1387
    %v1390 = vmul.f32 %v1383, %v1388
    %1392 = vrot.lane.b32.xlu0 %v1390, 32
    %v1393 = vpop.permute.xlu0 %1392
    %v1395 = vadd.f32 %v1385, %v1393
    %v1396 = vtanh.pop %v1395
    %1398 = vrot.lane.b32.xlu0 %v1396, 64
    %v1399 = vpop.permute.xlu0 %1398
    %v1401 = vmul.f32 %v1383, %v1399
    %1403 = vrot.lane.b32.xlu0 %v1401, 32
    %v1404 = vpop.permute.xlu0 %1403
    %v1405 = vsel %vm147, %v1404, 0
    %1407 = vmatprep.subr.mxu0 0.0
    %1408 = vmatpush1.msra.mxu0 %v128
    %1409 = vmatprep.subr.mxu0 0.0
    %1410 = vmatpush1.msra.mxu0 %v129
    %1411 = vmatprep.subr.mxu0 0.0
    %1412 = vmatpush1.msra.mxu0 %v130
    %1413 = vmatprep.subr.mxu0 0.0
    %1414 = vmatpush1.msra.mxu0 %v131
    %1415 = vmatprep.subr.mxu0 0.0
    %1416 = vmatpush1.msra.mxu0 0.0
    %1417 = vmatprep.subr.mxu0 0.0
    %1418 = vmatpush1.msra.mxu0 0.0
    %1419 = vmatprep.subr.mxu0 0.0
    %1420 = vmatpush1.msra.mxu0 0.0
    %1421 = vmatprep.subr.mxu0 0.0
    %1422 = vmatpush1.msra.mxu0 0.0
    %1423 = vmatprep.subr.mxu0 0.0
    %1424 = vmatpush1.msra.mxu0 0.0
    %1425 = vmatprep.subr.mxu0 0.0
    %1426 = vmatpush1.msra.mxu0 0.0
    %1427 = vmatprep.subr.mxu0 0.0
    %1428 = vmatpush1.msra.mxu0 0.0
    %1429 = vmatprep.subr.mxu0 0.0
    %1430 = vmatpush1.msra.mxu0 0.0
    %1431 = vmatprep.subr.mxu0 0.0
    %1432 = vmatpush1.msra.mxu0 0.0
    %1433 = vmatprep.subr.mxu0 0.0
    %1434 = vmatpush1.msra.mxu0 0.0
    %1435 = vmatprep.subr.mxu0 0.0
    %1436 = vmatpush1.msra.mxu0 0.0
    %1437 = vmatprep.subr.mxu0 0.0
    %1438 = vmatpush1.msra.mxu0 0.0
    %1439 = vmatprep.subr.mxu0 0.0
    %1440 = vmatpush1.msra.mxu0 0.0
    %1441 = vmatprep.subr.mxu0 0.0
    %1442 = vmatpush1.msra.mxu0 0.0
    %1443 = vmatprep.subr.mxu0 0.0
    %1444 = vmatpush1.msra.mxu0 0.0
    %1445 = vmatprep.subr.mxu0 0.0
    %1446 = vmatpush1.msra.mxu0 0.0
    %1447 = vmatprep.subr.mxu0 0.0
    %1448 = vmatpush1.msra.mxu0 0.0
    %1449 = vmatprep.subr.mxu0 0.0
    %1450 = vmatpush1.msra.mxu0 0.0
    %1451 = vmatprep.subr.mxu0 0.0
    %1452 = vmatpush1.msra.mxu0 0.0
    %1453 = vmatprep.subr.mxu0 0.0
    %1454 = vmatpush1.msra.mxu0 0.0
    %1455 = vmatprep.subr.mxu0 0.0
    %1456 = vmatpush1.msra.mxu0 0.0
    %1457 = vmatprep.subr.mxu0 0.0
    %1458 = vmatpush1.msra.mxu0 0.0
    %1459 = vmatprep.subr.mxu0 0.0
    %1460 = vmatpush1.msra.mxu0 0.0
    %1461 = vmatprep.subr.mxu0 0.0
    %1462 = vmatpush1.msra.mxu0 0.0
    %1463 = vmatprep.subr.mxu0 0.0
    %1464 = vmatpush1.msra.mxu0 0.0
    %1465 = vmatprep.subr.mxu0 0.0
    %1466 = vmatpush1.msra.mxu0 0.0
    %1467 = vmatprep.subr.mxu0 0.0
    %1468 = vmatpush1.msra.mxu0 0.0
    %1469 = vmatprep.subr.mxu0 0.0
    %1470 = vmatpush1.msra.mxu0 0.0
    %1471 = vmatprep.mubr.f32.mxu0 0.0
    %1472 = vmatmul.mubr.f32.gmra.mrb[0].mxu0 %v1405
    %v1473 = vpop.f32.mrb[0].mxu0
    %v1474 = vadd.f32 0.0, %v1473
    %v1475 = vpop.f32.mrb[0].mxu0
    %1476 = vdwg.mxu0
    %v1477 = vadd.f32 %v1077, %v1474
    %v1478 = vxor.u32 %v1477, 2147483648
    %v1479 = vmul.f32 %v1478, 1.442695
    %v1480 = vpow.pop %v1479
    %v1481 = vadd.f32 %v1480, 1.0
    %v1482 = vrcp.pop %v1481
    %v1483 = vmul.f32 1.0, %v1482
    %v1484 = vtanh.pop %v1477
    %v1485 = vmul.f32 %v1483, %v1395
    %1487 = vrot.lane.b32.xlu0 %v1484, 64
    %v1488 = vpop.permute.xlu0 %1487
    %v1490 = vmul.f32 %v1483, %v1488
    %1492 = vrot.lane.b32.xlu0 %v1490, 32
    %v1493 = vpop.permute.xlu0 %1492
    %v1495 = vadd.f32 %v1485, %v1493
    %v1496 = vtanh.pop %v1495
    %1498 = vrot.lane.b32.xlu0 %v1496, 64
    %v1499 = vpop.permute.xlu0 %1498
    %v1501 = vmul.f32 %v1483, %v1499
    %1503 = vrot.lane.b32.xlu0 %v1501, 32
    %v1504 = vpop.permute.xlu0 %1503
    %v1505 = vsel %vm147, %v1504, 0
    %1507 = vmatprep.subr.mxu0 0.0
    %1508 = vmatpush1.msra.mxu0 %v128
    %1509 = vmatprep.subr.mxu0 0.0
    %1510 = vmatpush1.msra.mxu0 %v129
    %1511 = vmatprep.subr.mxu0 0.0
    %1512 = vmatpush1.msra.mxu0 %v130
    %1513 = vmatprep.subr.mxu0 0.0
    %1514 = vmatpush1.msra.mxu0 %v131
    %1515 = vmatprep.subr.mxu0 0.0
    %1516 = vmatpush1.msra.mxu0 0.0
    %1517 = vmatprep.subr.mxu0 0.0
    %1518 = vmatpush1.msra.mxu0 0.0
    %1519 = vmatprep.subr.mxu0 0.0
    %1520 = vmatpush1.msra.mxu0 0.0
    %1521 = vmatprep.subr.mxu0 0.0
    %1522 = vmatpush1.msra.mxu0 0.0
    %1523 = vmatprep.subr.mxu0 0.0
    %1524 = vmatpush1.msra.mxu0 0.0
    %1525 = vmatprep.subr.mxu0 0.0
    %1526 = vmatpush1.msra.mxu0 0.0
    %1527 = vmatprep.subr.mxu0 0.0
    %1528 = vmatpush1.msra.mxu0 0.0
    %1529 = vmatprep.subr.mxu0 0.0
    %1530 = vmatpush1.msra.mxu0 0.0
    %1531 = vmatprep.subr.mxu0 0.0
    %1532 = vmatpush1.msra.mxu0 0.0
    %1533 = vmatprep.subr.mxu0 0.0
    %1534 = vmatpush1.msra.mxu0 0.0
    %1535 = vmatprep.subr.mxu0 0.0
    %1536 = vmatpush1.msra.mxu0 0.0
    %1537 = vmatprep.subr.mxu0 0.0
    %1538 = vmatpush1.msra.mxu0 0.0
    %1539 = vmatprep.subr.mxu0 0.0
    %1540 = vmatpush1.msra.mxu0 0.0
    %1541 = vmatprep.subr.mxu0 0.0
    %1542 = vmatpush1.msra.mxu0 0.0
    %1543 = vmatprep.subr.mxu0 0.0
    %1544 = vmatpush1.msra.mxu0 0.0
    %1545 = vmatprep.subr.mxu0 0.0
    %1546 = vmatpush1.msra.mxu0 0.0
    %1547 = vmatprep.subr.mxu0 0.0
    %1548 = vmatpush1.msra.mxu0 0.0
    %1549 = vmatprep.subr.mxu0 0.0
    %1550 = vmatpush1.msra.mxu0 0.0
    %1551 = vmatprep.subr.mxu0 0.0
    %1552 = vmatpush1.msra.mxu0 0.0
    %1553 = vmatprep.subr.mxu0 0.0
    %1554 = vmatpush1.msra.mxu0 0.0
    %1555 = vmatprep.subr.mxu0 0.0
    %1556 = vmatpush1.msra.mxu0 0.0
    %1557 = vmatprep.subr.mxu0 0.0
    %1558 = vmatpush1.msra.mxu0 0.0
    %1559 = vmatprep.subr.mxu0 0.0
    %1560 = vmatpush1.msra.mxu0 0.0
    %1561 = vmatprep.subr.mxu0 0.0
    %1562 = vmatpush1.msra.mxu0 0.0
    %1563 = vmatprep.subr.mxu0 0.0
    %1564 = vmatpush1.msra.mxu0 0.0
    %1565 = vmatprep.subr.mxu0 0.0
    %1566 = vmatpush1.msra.mxu0 0.0
    %1567 = vmatprep.subr.mxu0 0.0
    %1568 = vmatpush1.msra.mxu0 0.0
    %1569 = vmatprep.subr.mxu0 0.0
    %1570 = vmatpush1.msra.mxu0 0.0
    %1571 = vmatprep.mubr.f32.mxu0 0.0
    %1572 = vmatmul.mubr.f32.gmra.mrb[0].mxu0 %v1505
    %v1573 = vpop.f32.mrb[0].mxu0
    %v1574 = vadd.f32 0.0, %v1573
    %v1575 = vpop.f32.mrb[0].mxu0
    %1576 = vdwg.mxu0
    %v1577 = vadd.f32 %v1077, %v1574
    %v1578 = vxor.u32 %v1577, 2147483648
    %v1579 = vmul.f32 %v1578, 1.442695
    %v1580 = vpow.pop %v1579
    %v1581 = vadd.f32 %v1580, 1.0
    %v1582 = vrcp.pop %v1581
    %v1583 = vmul.f32 1.0, %v1582
    %v1584 = vtanh.pop %v1577
    %v1585 = vmul.f32 %v1583, %v1495
    %1587 = vrot.lane.b32.xlu0 %v1584, 64
    %v1588 = vpop.permute.xlu0 %1587
    %v1590 = vmul.f32 %v1583, %v1588
    %1592 = vrot.lane.b32.xlu0 %v1590, 32
    %v1593 = vpop.permute.xlu0 %1592
    %v1595 = vadd.f32 %v1585, %v1593
    %v1596 = vtanh.pop %v1595
    %1598 = vrot.lane.b32.xlu0 %v1596, 64
    %v1599 = vpop.permute.xlu0 %1598
    %v1601 = vmul.f32 %v1583, %v1599
    %1603 = vrot.lane.b32.xlu0 %v1601, 32
    %v1604 = vpop.permute.xlu0 %1603
    %v1605 = vsel %vm147, %v1604, 0
    %1607 = vmatprep.subr.mxu0 0.0
    %1608 = vmatpush1.msra.mxu0 %v128
    %1609 = vmatprep.subr.mxu0 0.0
    %1610 = vmatpush1.msra.mxu0 %v129
    %1611 = vmatprep.subr.mxu0 0.0
    %1612 = vmatpush1.msra.mxu0 %v130
    %1613 = vmatprep.subr.mxu0 0.0
    %1614 = vmatpush1.msra.mxu0 %v131
    %1615 = vmatprep.subr.mxu0 0.0
    %1616 = vmatpush1.msra.mxu0 0.0
    %1617 = vmatprep.subr.mxu0 0.0
    %1618 = vmatpush1.msra.mxu0 0.0
    %1619 = vmatprep.subr.mxu0 0.0
    %1620 = vmatpush1.msra.mxu0 0.0
    %1621 = vmatprep.subr.mxu0 0.0
    %1622 = vmatpush1.msra.mxu0 0.0
    %1623 = vmatprep.subr.mxu0 0.0
    %1624 = vmatpush1.msra.mxu0 0.0
    %1625 = vmatprep.subr.mxu0 0.0
    %1626 = vmatpush1.msra.mxu0 0.0
    %1627 = vmatprep.subr.mxu0 0.0
    %1628 = vmatpush1.msra.mxu0 0.0
    %1629 = vmatprep.subr.mxu0 0.0
    %1630 = vmatpush1.msra.mxu0 0.0
    %1631 = vmatprep.subr.mxu0 0.0
    %1632 = vmatpush1.msra.mxu0 0.0
    %1633 = vmatprep.subr.mxu0 0.0
    %1634 = vmatpush1.msra.mxu0 0.0
    %1635 = vmatprep.subr.mxu0 0.0
    %1636 = vmatpush1.msra.mxu0 0.0
    %1637 = vmatprep.subr.mxu0 0.0
    %1638 = vmatpush1.msra.mxu0 0.0
    %1639 = vmatprep.subr.mxu0 0.0
    %1640 = vmatpush1.msra.mxu0 0.0
    %1641 = vmatprep.subr.mxu0 0.0
    %1642 = vmatpush1.msra.mxu0 0.0
    %1643 = vmatprep.subr.mxu0 0.0
    %1644 = vmatpush1.msra.mxu0 0.0
    %1645 = vmatprep.subr.mxu0 0.0
    %1646 = vmatpush1.msra.mxu0 0.0
    %1647 = vmatprep.subr.mxu0 0.0
    %1648 = vmatpush1.msra.mxu0 0.0
    %1649 = vmatprep.subr.mxu0 0.0
    %1650 = vmatpush1.msra.mxu0 0.0
    %1651 = vmatprep.subr.mxu0 0.0
    %1652 = vmatpush1.msra.mxu0 0.0
    %1653 = vmatprep.subr.mxu0 0.0
    %1654 = vmatpush1.msra.mxu0 0.0
    %1655 = vmatprep.subr.mxu0 0.0
    %1656 = vmatpush1.msra.mxu0 0.0
    %1657 = vmatprep.subr.mxu0 0.0
    %1658 = vmatpush1.msra.mxu0 0.0
    %1659 = vmatprep.subr.mxu0 0.0
    %1660 = vmatpush1.msra.mxu0 0.0
    %1661 = vmatprep.subr.mxu0 0.0
    %1662 = vmatpush1.msra.mxu0 0.0
    %1663 = vmatprep.subr.mxu0 0.0
    %1664 = vmatpush1.msra.mxu0 0.0
    %1665 = vmatprep.subr.mxu0 0.0
    %1666 = vmatpush1.msra.mxu0 0.0
    %1667 = vmatprep.subr.mxu0 0.0
    %1668 = vmatpush1.msra.mxu0 0.0
    %1669 = vmatprep.subr.mxu0 0.0
    %1670 = vmatpush1.msra.mxu0 0.0
    %1671 = vmatprep.mubr.f32.mxu0 0.0
    %1672 = vmatmul.mubr.f32.gmra.mrb[0].mxu0 %v1605
    %v1673 = vpop.f32.mrb[0].mxu0
    %v1674 = vadd.f32 0.0, %v1673
    %v1675 = vpop.f32.mrb[0].mxu0
    %1676 = vdwg.mxu0
    %v1677 = vadd.f32 %v1077, %v1674
    %v1678 = vxor.u32 %v1677, 2147483648
    %v1679 = vmul.f32 %v1678, 1.442695
    %v1680 = vpow.pop %v1679
    %v1681 = vadd.f32 %v1680, 1.0
    %v1682 = vrcp.pop %v1681
    %v1683 = vmul.f32 1.0, %v1682
    %v1684 = vtanh.pop %v1677
    %v1685 = vmul.f32 %v1683, %v1595
    %1687 = vrot.lane.b32.xlu0 %v1684, 64
    %v1688 = vpop.permute.xlu0 %1687
    %v1690 = vmul.f32 %v1683, %v1688
    %1692 = vrot.lane.b32.xlu0 %v1690, 32
    %v1693 = vpop.permute.xlu0 %1692
    %v1695 = vadd.f32 %v1685, %v1693
    %v1696 = vtanh.pop %v1695
    %1698 = vrot.lane.b32.xlu0 %v1696, 64
    %v1699 = vpop.permute.xlu0 %1698
    %v1701 = vmul.f32 %v1683, %v1699
    %1703 = vrot.lane.b32.xlu0 %v1701, 32
    %v1704 = vpop.permute.xlu0 %1703
    %v1705 = vsel %vm147, %v1704, 0
    %1707 = vmatprep.subr.mxu0 0.0
    %1708 = vmatpush1.msra.mxu0 %v128
    %1709 = vmatprep.subr.mxu0 0.0
    %1710 = vmatpush1.msra.mxu0 %v129
    %1711 = vmatprep.subr.mxu0 0.0
    %1712 = vmatpush1.msra.mxu0 %v130
    %1713 = vmatprep.subr.mxu0 0.0
    %1714 = vmatpush1.msra.mxu0 %v131
    %1715 = vmatprep.subr.mxu0 0.0
    %1716 = vmatpush1.msra.mxu0 0.0
    %1717 = vmatprep.subr.mxu0 0.0
    %1718 = vmatpush1.msra.mxu0 0.0
    %1719 = vmatprep.subr.mxu0 0.0
    %1720 = vmatpush1.msra.mxu0 0.0
    %1721 = vmatprep.subr.mxu0 0.0
    %1722 = vmatpush1.msra.mxu0 0.0
    %1723 = vmatprep.subr.mxu0 0.0
    %1724 = vmatpush1.msra.mxu0 0.0
    %1725 = vmatprep.subr.mxu0 0.0
    %1726 = vmatpush1.msra.mxu0 0.0
    %1727 = vmatprep.subr.mxu0 0.0
    %1728 = vmatpush1.msra.mxu0 0.0
    %1729 = vmatprep.subr.mxu0 0.0
    %1730 = vmatpush1.msra.mxu0 0.0
    %1731 = vmatprep.subr.mxu0 0.0
    %1732 = vmatpush1.msra.mxu0 0.0
    %1733 = vmatprep.subr.mxu0 0.0
    %1734 = vmatpush1.msra.mxu0 0.0
    %1735 = vmatprep.subr.mxu0 0.0
    %1736 = vmatpush1.msra.mxu0 0.0
    %1737 = vmatprep.subr.mxu0 0.0
    %1738 = vmatpush1.msra.mxu0 0.0
    %1739 = vmatprep.subr.mxu0 0.0
    %1740 = vmatpush1.msra.mxu0 0.0
    %1741 = vmatprep.subr.mxu0 0.0
    %1742 = vmatpush1.msra.mxu0 0.0
    %1743 = vmatprep.subr.mxu0 0.0
    %1744 = vmatpush1.msra.mxu0 0.0
    %1745 = vmatprep.subr.mxu0 0.0
    %1746 = vmatpush1.msra.mxu0 0.0
    %1747 = vmatprep.subr.mxu0 0.0
    %1748 = vmatpush1.msra.mxu0 0.0
    %1749 = vmatprep.subr.mxu0 0.0
    %1750 = vmatpush1.msra.mxu0 0.0
    %1751 = vmatprep.subr.mxu0 0.0
    %1752 = vmatpush1.msra.mxu0 0.0
    %1753 = vmatprep.subr.mxu0 0.0
    %1754 = vmatpush1.msra.mxu0 0.0
    %1755 = vmatprep.subr.mxu0 0.0
    %1756 = vmatpush1.msra.mxu0 0.0
    %1757 = vmatprep.subr.mxu0 0.0
    %1758 = vmatpush1.msra.mxu0 0.0
    %1759 = vmatprep.subr.mxu0 0.0
    %1760 = vmatpush1.msra.mxu0 0.0
    %1761 = vmatprep.subr.mxu0 0.0
    %1762 = vmatpush1.msra.mxu0 0.0
    %1763 = vmatprep.subr.mxu0 0.0
    %1764 = vmatpush1.msra.mxu0 0.0
    %1765 = vmatprep.subr.mxu0 0.0
    %1766 = vmatpush1.msra.mxu0 0.0
    %1767 = vmatprep.subr.mxu0 0.0
    %1768 = vmatpush1.msra.mxu0 0.0
    %1769 = vmatprep.subr.mxu0 0.0
    %1770 = vmatpush1.msra.mxu0 0.0
    %1771 = vmatprep.mubr.f32.mxu0 0.0
    %1772 = vmatmul.mubr.f32.gmra.mrb[0].mxu0 %v1705
    %v1773 = vpop.f32.mrb[0].mxu0
    %v1774 = vadd.f32 0.0, %v1773
    %v1775 = vpop.f32.mrb[0].mxu0
    %1776 = vdwg.mxu0
    %v1777 = vadd.f32 %v1077, %v1774
    %v1778 = vxor.u32 %v1777, 2147483648
    %v1779 = vmul.f32 %v1778, 1.442695
    %v1780 = vpow.pop %v1779
    %v1781 = vadd.f32 %v1780, 1.0
    %v1782 = vrcp.pop %v1781
    %v1783 = vmul.f32 1.0, %v1782
    %v1784 = vtanh.pop %v1777
    %v1785 = vmul.f32 %v1783, %v1695
    %1787 = vrot.lane.b32.xlu0 %v1784, 64
    %v1788 = vpop.permute.xlu0 %1787
    %v1790 = vmul.f32 %v1783, %v1788
    %1792 = vrot.lane.b32.xlu0 %v1790, 32
    %v1793 = vpop.permute.xlu0 %1792
    %v1795 = vadd.f32 %v1785, %v1793
    %v1796 = vtanh.pop %v1795
    %1798 = vrot.lane.b32.xlu0 %v1796, 64
    %v1799 = vpop.permute.xlu0 %1798
    %v1801 = vmul.f32 %v1783, %v1799
    %v1802 = vld [vmem:[#allocation11] sm:$0xff]
    %v1803 = vld [vmem:[#allocation11 + $0x8] sm:$0xff]
    %v1804 = vld [vmem:[#allocation11 + $0x10] sm:$0xff]
    %v1805 = vld [vmem:[#allocation11 + $0x18] sm:$0xff]
    %v1806 = vld [vmem:[%s8] sm:$0x1]
    %v1808 = vlaneseq
    %v1809 = vshrl.u32 %v1808, 7
    %v1810 = vsub.s32 0, %v1809
    %v1811 = vrot.slane %v1806, %v1810
    %1814 = vrot.lane.b32.xlu0 %v1801, 32
    %v1815 = vpop.permute.xlu0 %1814
    %v1816 = vsel %vm147, %v1815, 0
    %1818 = vmatprep.subr.mxu0 0.0
    %1819 = vmatpush1.msra.mxu0 %v1802
    %1820 = vmatprep.subr.mxu0 0.0
    %1821 = vmatpush1.msra.mxu0 %v1803
    %1822 = vmatprep.subr.mxu0 0.0
    %1823 = vmatpush1.msra.mxu0 %v1804
    %1824 = vmatprep.subr.mxu0 0.0
    %1825 = vmatpush1.msra.mxu0 %v1805
    %1826 = vmatprep.subr.mxu0 0.0
    %1827 = vmatpush1.msra.mxu0 0.0
    %1828 = vmatprep.subr.mxu0 0.0
    %1829 = vmatpush1.msra.mxu0 0.0
    %1830 = vmatprep.subr.mxu0 0.0
    %1831 = vmatpush1.msra.mxu0 0.0
    %1832 = vmatprep.subr.mxu0 0.0
    %1833 = vmatpush1.msra.mxu0 0.0
    %1834 = vmatprep.subr.mxu0 0.0
    %1835 = vmatpush1.msra.mxu0 0.0
    %1836 = vmatprep.subr.mxu0 0.0
    %1837 = vmatpush1.msra.mxu0 0.0
    %1838 = vmatprep.subr.mxu0 0.0
    %1839 = vmatpush1.msra.mxu0 0.0
    %1840 = vmatprep.subr.mxu0 0.0
    %1841 = vmatpush1.msra.mxu0 0.0
    %1842 = vmatprep.subr.mxu0 0.0
    %1843 = vmatpush1.msra.mxu0 0.0
    %1844 = vmatprep.subr.mxu0 0.0
    %1845 = vmatpush1.msra.mxu0 0.0
    %1846 = vmatprep.subr.mxu0 0.0
    %1847 = vmatpush1.msra.mxu0 0.0
    %1848 = vmatprep.subr.mxu0 0.0
    %1849 = vmatpush1.msra.mxu0 0.0
    %1850 = vmatprep.subr.mxu0 0.0
    %1851 = vmatpush1.msra.mxu0 0.0
    %1852 = vmatprep.subr.mxu0 0.0
    %1853 = vmatpush1.msra.mxu0 0.0
    %1854 = vmatprep.subr.mxu0 0.0
    %1855 = vmatpush1.msra.mxu0 0.0
    %1856 = vmatprep.subr.mxu0 0.0
    %1857 = vmatpush1.msra.mxu0 0.0
    %1858 = vmatprep.subr.mxu0 0.0
    %1859 = vmatpush1.msra.mxu0 0.0
    %1860 = vmatprep.subr.mxu0 0.0
    %1861 = vmatpush1.msra.mxu0 0.0
    %1862 = vmatprep.subr.mxu0 0.0
    %1863 = vmatpush1.msra.mxu0 0.0
    %1864 = vmatprep.subr.mxu0 0.0
    %1865 = vmatpush1.msra.mxu0 0.0
    %1866 = vmatprep.subr.mxu0 0.0
    %1867 = vmatpush1.msra.mxu0 0.0
    %1868 = vmatprep.subr.mxu0 0.0
    %1869 = vmatpush1.msra.mxu0 0.0
    %1870 = vmatprep.subr.mxu0 0.0
    %1871 = vmatpush1.msra.mxu0 0.0
    %1872 = vmatprep.subr.mxu0 0.0
    %1873 = vmatpush1.msra.mxu0 0.0
    %1874 = vmatprep.subr.mxu0 0.0
    %1875 = vmatpush1.msra.mxu0 0.0
    %1876 = vmatprep.subr.mxu0 0.0
    %1877 = vmatpush1.msra.mxu0 0.0
    %1878 = vmatprep.subr.mxu0 0.0
    %1879 = vmatpush1.msra.mxu0 0.0
    %1880 = vmatprep.subr.mxu0 0.0
    %1881 = vmatpush1.msra.mxu0 0.0
    %1882 = vmatprep.mubr.f32.mxu0 0.0
    %1883 = vmatmul.mubr.f32.gmra.mrb[0].mxu0 %v1101
    %v1884 = vpop.f32.mrb[0].mxu0
    %v1885 = vadd.f32 %v1811, %v1884
    %v1886 = vpop.f32.mrb[0].mxu0
    %1887 = vmatprep.mubr.f32.mxu0 0.0
    %1888 = vmatmul.mubr.f32.gmra.mrb[0].mxu0 %v1205
    %v1889 = vpop.f32.mrb[0].mxu0
    %v1890 = vadd.f32 %v1811, %v1889
    %v1891 = vpop.f32.mrb[0].mxu0
    %1892 = vmatprep.mubr.f32.mxu0 0.0
    %1893 = vmatmul.mubr.f32.gmra.mrb[0].mxu0 %v1305
    %v1894 = vpop.f32.mrb[0].mxu0
    %v1895 = vadd.f32 %v1811, %v1894
    %v1896 = vpop.f32.mrb[0].mxu0
    %1897 = vmatprep.mubr.f32.mxu0 0.0
    %1898 = vmatmul.mubr.f32.gmra.mrb[0].mxu0 %v1405
    %v1899 = vpop.f32.mrb[0].mxu0
    %v1900 = vadd.f32 %v1811, %v1899
    %v1901 = vpop.f32.mrb[0].mxu0
    %1902 = vmatprep.mubr.f32.mxu0 0.0
    %1903 = vmatmul.mubr.f32.gmra.mrb[0].mxu0 %v1505
    %v1904 = vpop.f32.mrb[0].mxu0
    %v1905 = vadd.f32 %v1811, %v1904
    %v1906 = vpop.f32.mrb[0].mxu0
    %1907 = vmatprep.mubr.f32.mxu0 0.0
    %1908 = vmatmul.mubr.f32.gmra.mrb[0].mxu0 %v1605
    %v1909 = vpop.f32.mrb[0].mxu0
    %v1910 = vadd.f32 %v1811, %v1909
    %v1911 = vpop.f32.mrb[0].mxu0
    %1912 = vmatprep.mubr.f32.mxu0 0.0
    %1913 = vmatmul.mubr.f32.gmra.mrb[0].mxu0 %v1705
    %v1914 = vpop.f32.mrb[0].mxu0
    %v1915 = vadd.f32 %v1811, %v1914
    %v1916 = vpop.f32.mrb[0].mxu0
    %1917 = vmatprep.mubr.f32.mxu0 0.0
    %1918 = vmatmul.mubr.f32.gmra.mrb[0].mxu0 %v1816
    %v1919 = vpop.f32.mrb[0].mxu0
    %v1920 = vadd.f32 %v1811, %v1919
    %v1921 = vpop.f32.mrb[0].mxu0
    %1922 = vdwg.mxu0
    %1923 = vst [vmem:[#allocation13] sm:$0xff] %v1885
    %1924 = vst [vmem:[#allocation13 + $0x8] sm:$0xff] %v1890
    %1925 = vst [vmem:[#allocation13 + $0x10] sm:$0xff] %v1895
    %1926 = vst [vmem:[#allocation13 + $0x18] sm:$0xff] %v1900
    %1927 = vst [vmem:[#allocation13 + $0x20] sm:$0xff] %v1905
    %1928 = vst [vmem:[#allocation13 + $0x28] sm:$0xff] %v1910
    %1929 = vst [vmem:[#allocation13 + $0x30] sm:$0xff] %v1915
    %1930 = vst [vmem:[#allocation13 + $0x38] sm:$0xff] %v1920
    // Predicated region
    $region62: #{tpu_custom_call.1} parent=1 // pred_check
      _
    $region63: #{tpu_custom_call.1} parent=1 // pred_check_branch
      %1932 = sbr.rel (0) target = $region65
    $region64: #{tpu_custom_call.1} parent=1 // pred_region
      %s1934 = ssub.s32 1024, 1024
      %1935 = vsyncadd [#allocation4], %s1934
      %s1936 = sshll.u32 [#allocation13], 4
      %s1937 = int_to_ptr.vmem [resolvable:$true] %s1936
      %1942 = dma.vmem_to_hbm [thread:$0]  %s1937, 1024, %s9, [#allocation4], 128, 128, 8
    $region65: #{tpu_custom_call.1} parent=1 // pred_fallthru
      _
    // Predicated region
    $region66: #{tpu_custom_call.1} parent=1 // pred_check
      _
    $region67: #{tpu_custom_call.1} parent=1 // pred_check_branch
      %1944 = sbr.rel (0) target = $region69
    $region68: #{tpu_custom_call.1} parent=1 // pred_region
      %1945 = dma.done [#allocation4], 1024
    $region69: #{tpu_custom_call.1} parent=1 // pred_fallthru
      _
    %1946 = vsyncpa [#allocation3], 1
    %1947 = vsyncpa [#allocation6], 1
    %1948 = vsyncpa [#allocation9], 1
    %1949 = vsyncpa [#allocation12], 1
    %1950 = vsyncpa [#allocation4], 1

</llo_original>
